<compile_context>
chip_gen: v6e
topology: v6e:2x2x1
jax: 0.10.0
libtpu: 0.0.40
codegen_flags: <defaults>
</compile_context>

<pallas_src>
import functools
import math

import jax
import jax.numpy as jnp
import numpy as np
from jax.experimental import pallas as pl
from jax.experimental.pallas import tpu as pltpu

HEADS = 8            # SparseAttention(heads=8, attn_mode='all')
LN_EPS = 1e-5        # torch.nn.LayerNorm default eps
P_DROP_PE = 0.1      # PositionalEncoding dropout
P_DROP_ATTN = 0.5    # dropout1
P_DROP_FFN = 0.1     # PositionwiseFeedForward dropout
P_DROP_OUT = 0.5     # dropout2


def _pe_rows(seq_len, d_model):
    """First `seq_len` rows of the PositionalEncoding buffer as a trace-time
    numpy constant (the 35000-row module buffer is never materialised)."""
    position = np.arange(seq_len, dtype=np.float32)[:, None]
    div_term = np.exp(np.arange(0, d_model, 2, dtype=np.float32)
                      * (-math.log(10000.0) / d_model))
    pe = np.zeros((seq_len, d_model), dtype=np.float32)
    pe[:, 0::2] = np.sin(position * div_term)
    pe[:, 1::2] = np.cos(position * div_term)
    return pe


def _vmem_limit_bytes():
    """Generation-aware scoped-VMEM budget (v7x: 64 MiB/core, v5e/v6e: 128)."""
    try:
        kind = jax.devices()[0].device_kind.lower()
    except Exception:
        kind = ""
    if "v7" in kind:
        return 48 * 1024 * 1024
    if any(t in kind for t in ("v5 lite", "v5e", "v6")):
        return 100 * 1024 * 1024
    return 64 * 1024 * 1024


def _encoder_kernel(seed_ref,
                    x_ref, emb_ref, pe_ref,
                    g1_ref, be1_ref, g2_ref, be2_ref,
                    w1_ref, b1_ref, w2_ref, b2_ref,
                    wf_ref, bf_ref,
                    o_ref, *, d, t_rows, n_inner, s_total, s_pad, training):
    """One grid step = T positional rows, each an independent [B, d] encoder
    block; their fc2 outputs are summed into the resident output block."""
    f32 = jnp.float32
    bf16 = jnp.bfloat16
    c = pl.program_id(0)            # outer ("parallel") axis -> megacore
    i = pl.program_id(1)            # inner ("arbitrary") axis -> accumulation
    B = x_ref.shape[0]
    T = t_rows

    @pl.when(i == 0)
    def _init():
        o_ref[...] = jnp.zeros_like(o_ref)

    if training:
        # Hardware PRNG (real TensorCore only); hashed (seed, c, i) stream.
        pltpu.prng_seed(seed_ref[0], c, i)

    def dropout(v, p):
        if not training or p <= 0.0:
            return v
        bits = pltpu.prng_random_bits(v.shape)
        if bits.dtype != jnp.uint32:
            bits = pltpu.bitcast(bits, jnp.uint32)
        # keep iff bits >= p*2^32; keep/scale folded into a single multiply.
        thr = jnp.uint32(min(int(round(p * 4294967296.0)), 4294967295))
        return v * ((bits >= thr).astype(f32) * f32(1.0 / (1.0 - p)))

    def layer_norm(v, g, b):
        mu = jnp.mean(v, axis=-1, keepdims=True)
        var = jnp.mean(jnp.square(v - mu), axis=-1, keepdims=True)
        return (v - mu) * jax.lax.rsqrt(var + LN_EPS) * g + b   # rsqrt -> EUP

    x = x_ref[...]                 # (B, d)   flattened input (x_copy)
    emb = emb_ref[...]             # (B, d)   input_embedding(x)
    pe_blk = pe_ref[0]             # (T, d)   T positional rows for this step

    # PositionalEncoding: dropout(x_copy + pe[t]); + embedding; relu.
    h = jnp.maximum(dropout(x[None, :, :] + pe_blk[:, None, :], P_DROP_PE)
                    + emb[None, :, :], 0.0)                       # (T, B, d)

    # blocksparse_attention_impl(attn_mode='all'), batched over the T rows.
    # Scale intentionally matches torch: 1/sqrt(d // heads) (integer divide).
    scale = f32(1.0 / math.sqrt(d // HEADS))
    s = jnp.einsum("tbd,tcd->tbc", h, h, preferred_element_type=f32) * scale
    s = s - jnp.max(s, axis=-1, keepdims=True)
    e = jnp.exp(s)
    p = e * (1.0 / jnp.sum(e, axis=-1, keepdims=True))           # (T, B, B)
    a = dropout(jnp.einsum("tbc,tcd->tbd", p, h, preferred_element_type=f32),
                P_DROP_ATTN)

    # norm1(attention + x_copy); flatten (T,B) so the FFN/fc2 GEMMs see M=T*B.
    z = layer_norm(a + x[None, :, :], g1_ref[...], be1_ref[...])  # (T, B, d)
    z2 = z.reshape(T * B, d)

    # PositionwiseFeedForward: w2(dropout(relu(w1 z))).  bf16 MXU operands,
    # f32 accumulation; elementwise math stays f32 (no bf16 VPU on v5e).
    u = jnp.maximum(jnp.dot(z2.astype(bf16), w1_ref[...],
                            preferred_element_type=f32) + b1_ref[...], 0.0)
    ffn = jnp.dot(dropout(u, P_DROP_FFN).astype(bf16), w2_ref[...],
                  preferred_element_type=f32) + b2_ref[...]
    x2 = ffn + layer_norm(z2, g2_ref[...], be2_ref[...])          # + norm2(z)

    # fc2 -> dropout2 -> relu.
    o = jnp.dot(x2.astype(bf16), wf_ref[...],
                preferred_element_type=f32) + bf_ref[...]
    o = jnp.maximum(dropout(o, P_DROP_OUT), 0.0).reshape(T, B, -1)

    if s_pad != s_total:
        # Zero the padded positional rows of the last tile before accumulating.
        rows = ((c * n_inner + i) * T
                + jax.lax.broadcasted_iota(jnp.int32, (T, 1, 1), 0))
        o = o * (rows < s_total).astype(f32)

    # torch.mean(x, 0): accumulate the row-sum in the VMEM-resident output
    # block; one lane-dense HBM writeback per parallel slice (divide in XLA).
    o_ref[...] += jnp.sum(o, axis=0)[None]


def _pinned(block_shape):
    """Full-array block with a constant index: fetched once, kept
    VMEM-resident, single-buffered (no second pipeline buffer needed)."""
    zeros = (0,) * len(block_shape)
    return pl.BlockSpec(block_shape, lambda c, i, seed_ref: zeros,
                        pipeline_mode=pl.Buffered(1))


@functools.partial(jax.jit, static_argnames=("training",))
def encoder_sparse_forward(x, params, seed=0, *, training=False):
    """Forward pass of Encoder_sparse.  x: [B, H, W] float32 -> [B, out]."""
    B = x.shape[0]
    x_flat = x.reshape(B, -1).astype(jnp.float32)        # torch.flatten(x, 1)
    d = x_flat.shape[1]
    out_dim = params["wf"].shape[1]
    S = B                                                # pe rows = x.size(0)
    assert d % 2 == 0, "PositionalEncoding buffer needs an even d_model"

    vmem_limit = _vmem_limit_bytes()
    budget = int(0.75 * vmem_limit)

    # Resident working set: bf16 weights (single-buffered), f32 small operands,
    # double-buffered output block.
    fixed_bytes = (2 * (8 * d * d + d * out_dim)             # w1, w2, wf (bf16)
                   + 4 * (2 * B * d + 9 * d + out_dim)       # x, emb, ln, biases
                   + 2 * 4 * B * out_dim)                    # out block (x2 buf)
    assert fixed_bytes < budget, (
        "FFN weights too large to stay VMEM-resident for this d_model; tile "
        "the d/4d axes with an inner pltpu.emit_pipeline.")

    # Row tile T (positional rows fused per grid step): as many rows as the
    # per-step activation working set allows.
    per_row_bytes = (B * (4 * (12 * d + B + out_dim) + 2 * 6 * d)  # activations
                     + 2 * 4 * d)                                  # pe (x2 buf)
    t_cap = max(1, (budget - fixed_bytes) // per_row_bytes)
    T = int(min(S, t_cap))
    num_tiles = (S + T - 1) // T
    s_pad = num_tiles * T
    n_outer = 2 if (num_tiles >= 2 and num_tiles % 2 == 0) else 1
    n_inner = num_tiles // n_outer

    hp = jax.lax.Precision.HIGHEST
    # input_embedding is grid-independent -> computed once here (XLA fuses it).
    emb = jnp.dot(x_flat, params["w_emb"], precision=hp) + params["b_emb"]

    pe_np = np.zeros((s_pad, d), dtype=np.float32)
    pe_np[:S] = _pe_rows(S, d)
    pe = jnp.asarray(pe_np).reshape(num_tiles, T, d)

    row = lambda v: jnp.reshape(v, (1, -1)).astype(jnp.float32)
    bf16 = jnp.bfloat16
    operands = (
        x_flat, emb, pe,
        row(params["g1"]), row(params["be1"]),
        row(params["g2"]), row(params["be2"]),
        params["w1"].astype(bf16), row(params["b1"]),
        params["w2"].astype(bf16), row(params["b2"]),
        params["wf"].astype(bf16), row(params["bf"]),
    )

    in_specs = [
        _pinned((B, d)),                                           # x_flat
        _pinned((B, d)),                                           # emb
        pl.BlockSpec((1, T, d),
                     lambda c, i, seed_ref: (c * n_inner + i, 0, 0)),  # pe tile
        _pinned((1, d)), _pinned((1, d)),                          # norm1 g/b
        _pinned((1, d)), _pinned((1, d)),                          # norm2 g/b
        _pinned((d, 4 * d)), _pinned((1, 4 * d)),                  # ffn w1/b1
        _pinned((4 * d, d)), _pinned((1, d)),                      # ffn w2/b2
        _pinned((d, out_dim)), _pinned((1, out_dim)),              # fc2 w/b
    ]

    partials = pl.pallas_call(
        functools.partial(_encoder_kernel, d=d, t_rows=T, n_inner=n_inner,
                          s_total=S, s_pad=s_pad, training=training),
        out_shape=jax.ShapeDtypeStruct((n_outer, B, out_dim), jnp.float32),
        grid_spec=pltpu.PrefetchScalarGridSpec(
            num_scalar_prefetch=1,
            grid=(n_outer, n_inner),
            in_specs=in_specs,
            out_specs=pl.BlockSpec((1, B, out_dim),
                                   lambda c, i, seed_ref: (c, 0, 0)),
        ),
        compiler_params=pltpu.CompilerParams(
            dimension_semantics=("parallel", "arbitrary"),
            vmem_limit_bytes=vmem_limit,
        ),
    )(jnp.reshape(jnp.asarray(seed, jnp.int32), (1,)), *operands)

    # torch.mean(x, 0): tiny cross-core partial-sum + scale, left to XLA.
    return jnp.sum(partials, axis=0) * (1.0 / S)


def encoder_sparse_reference(x, params):
    """Pure-JAX eval-mode reference for Encoder_sparse.forward (f32 HIGHEST)."""
    hp = jax.lax.Precision.HIGHEST
    B = x.shape[0]
    xf = x.reshape(B, -1).astype(jnp.float32)
    d = xf.shape[1]

    def ln(v, g, b):
        mu = jnp.mean(v, axis=-1, keepdims=True)
        var = jnp.mean(jnp.square(v - mu), axis=-1, keepdims=True)
        return (v - mu) * (1.0 / jnp.sqrt(var + LN_EPS)) * g + b

    emb = jnp.dot(xf, params["w_emb"], precision=hp) + params["b_emb"]
    pe = jnp.asarray(_pe_rows(B, d))                         # (B, d)
    y = xf[None, :, :] + pe[:, None, :]                      # (B, B, d)
    h = jax.nn.relu(y + emb[None, :, :])

    scale = 1.0 / math.sqrt(d // HEADS)
    s = jnp.einsum("ijd,ikd->ijk", h, h, precision=hp) * scale
    w = jax.nn.softmax(s, axis=-1)
    a = jnp.einsum("ijk,ikd->ijd", w, h, precision=hp)

    z = ln(a + xf[None, :, :], params["g1"], params["be1"])
    u = jax.nn.relu(jnp.einsum("ijd,df->ijf", z, params["w1"], precision=hp)
                    + params["b1"])
    ffn = jnp.einsum("ijf,fd->ijd", u, params["w2"], precision=hp) + params["b2"]
    x2 = ffn + ln(z, params["g2"], params["be2"])
    o = jax.nn.relu(jnp.einsum("ijd,do->ijo", x2, params["wf"], precision=hp)
                    + params["bf"])
    return jnp.mean(o, axis=0)


if __name__ == "__main__":
    # x: [batch, H, W] -> d_model = H * W = 128 ; output_size[-1] = 16
    B, H, W = 4, 8, 16
    D = H * W
    OUT = 16

    keys = jax.random.split(jax.random.PRNGKey(0), 9)

    def linear_init(kw, kb, fan_in, shape_w, shape_b):
        bound = 1.0 / math.sqrt(fan_in)
        w = jax.random.uniform(kw, shape_w, jnp.float32, -bound, bound)
        b = jax.random.uniform(kb, shape_b, jnp.float32, -bound, bound)
        return w, b

    # Weights are stored [in, out] (transpose of torch's nn.Linear.weight)
    # so the kernel computes plain x @ W + b.
    w_emb, b_emb = linear_init(keys[0], keys[1], D, (D, D), (D,))
    w1, b1 = linear_init(keys[2], keys[3], D, (D, 4 * D), (4 * D,))
    w2, b2 = linear_init(keys[4], keys[5], 4 * D, (4 * D, D), (D,))
    wf, bf = linear_init(keys[6], keys[7], D, (D, OUT), (OUT,))

    params = dict(
        w_emb=w_emb, b_emb=b_emb,
        g1=jnp.ones((D,), jnp.float32), be1=jnp.zeros((D,), jnp.float32),
        g2=jnp.ones((D,), jnp.float32), be2=jnp.zeros((D,), jnp.float32),
        w1=w1, b1=b1, w2=w2, b2=b2, wf=wf, bf=bf,
    )

    x = jax.random.normal(keys[8], (B, H, W), jnp.float32)

    # Standard (eval-mode) forward: all dropouts identity, as in module.eval().
    # Training-mode dropout is implemented via the on-chip PRNG
    # (encoder_sparse_forward(..., training=True)) and requires execution on a
    # real TPU TensorCore (no CPU/interpret lowering), so it is not run here.
    out = jax.block_until_ready(encoder_sparse_forward(x, params, training=False))
    ref = jax.block_until_ready(encoder_sparse_reference(x, params))
    assert out.shape == (B, OUT)
    # bf16 MXU operands in the kernel vs f32 HIGHEST reference -> bf16-class
    # tolerance.
    np.testing.assert_allclose(np.asarray(out), np.asarray(ref),
                               rtol=2e-2, atol=2e-2)

    print("KERNEL_OK")
</pallas_src>

<mosaic_0001>
module attributes {stable_mosaic.version = 11 : i64} {
  func.func @_encoder_kernel(%arg0: i32, %arg1: i32, %arg2: memref<1xi32, #tpu.memory_space<smem>>, %arg3: memref<4x128xf32, #tpu.memory_space<vmem>>, %arg4: memref<4x128xf32, #tpu.memory_space<vmem>>, %arg5: memref<1x4x128xf32, #tpu.memory_space<vmem>>, %arg6: memref<1x128xf32, #tpu.memory_space<vmem>>, %arg7: memref<1x128xf32, #tpu.memory_space<vmem>>, %arg8: memref<1x128xf32, #tpu.memory_space<vmem>>, %arg9: memref<1x128xf32, #tpu.memory_space<vmem>>, %arg10: memref<128x512xbf16, #tpu.memory_space<vmem>>, %arg11: memref<1x512xf32, #tpu.memory_space<vmem>>, %arg12: memref<512x128xbf16, #tpu.memory_space<vmem>>, %arg13: memref<1x128xf32, #tpu.memory_space<vmem>>, %arg14: memref<128x16xbf16, #tpu.memory_space<vmem>>, %arg15: memref<1x16xf32, #tpu.memory_space<vmem>>, %arg16: memref<1x4x16xf32, #tpu.memory_space<vmem>>) attributes {dimension_semantics = [#tpu.dimension_semantics<parallel>, #tpu.dimension_semantics<arbitrary>], iteration_bounds = array<i64: 1, 1>, scalar_prefetch = 1 : i64, scratch_operands = 0 : i64, tpu.core_type = #tpu.core_type<tc>, window_params = [{pipeline_mode = #tpu.pipeline_mode<synchronous>, transform_indices = @transform_0, window_bounds = array<i64: 4, 128>}, {pipeline_mode = #tpu.pipeline_mode<synchronous>, transform_indices = @transform_1, window_bounds = array<i64: 4, 128>}, {transform_indices = @transform_2, window_bounds = array<i64: 1, 4, 128>}, {pipeline_mode = #tpu.pipeline_mode<synchronous>, transform_indices = @transform_3, window_bounds = array<i64: 1, 128>}, {pipeline_mode = #tpu.pipeline_mode<synchronous>, transform_indices = @transform_4, window_bounds = array<i64: 1, 128>}, {pipeline_mode = #tpu.pipeline_mode<synchronous>, transform_indices = @transform_5, window_bounds = array<i64: 1, 128>}, {pipeline_mode = #tpu.pipeline_mode<synchronous>, transform_indices = @transform_6, window_bounds = array<i64: 1, 128>}, {pipeline_mode = #tpu.pipeline_mode<synchronous>, transform_indices = @transform_7, window_bounds = array<i64: 128, 512>}, {pipeline_mode = #tpu.pipeline_mode<synchronous>, transform_indices = @transform_8, window_bounds = array<i64: 1, 512>}, {pipeline_mode = #tpu.pipeline_mode<synchronous>, transform_indices = @transform_9, window_bounds = array<i64: 512, 128>}, {pipeline_mode = #tpu.pipeline_mode<synchronous>, transform_indices = @transform_10, window_bounds = array<i64: 1, 128>}, {pipeline_mode = #tpu.pipeline_mode<synchronous>, transform_indices = @transform_11, window_bounds = array<i64: 128, 16>}, {pipeline_mode = #tpu.pipeline_mode<synchronous>, transform_indices = @transform_12, window_bounds = array<i64: 1, 16>}, {transform_indices = @transform_13, window_bounds = array<i64: 1, 4, 16>}]} {
    %c0_i32 = arith.constant 0 : i32
    %0 = arith.cmpi eq, %arg1, %c0_i32 : i32
    %1 = arith.extui %0 : i1 to i32
    %c0_i32_0 = arith.constant 0 : i32
    %2 = arith.cmpi ne, %1, %c0_i32_0 : i32
    scf.if %2 {
      %cst_55 = arith.constant 0.000000e+00 : f32
      %115 = vector.broadcast %cst_55 : f32 to vector<1x4x16xf32>
      %c0_56 = arith.constant 0 : index
      %c0_57 = arith.constant 0 : index
      %c0_58 = arith.constant 0 : index
      %116 = vector.load %arg16[%c0_56, %c0_57, %c0_58] : memref<1x4x16xf32, #tpu.memory_space<vmem>>, vector<1x4x16xf32>
      tpu.vector_store %arg16[%c0_56, %c0_57, %c0_58], %115 {strides = array<i32>} : memref<1x4x16xf32, #tpu.memory_space<vmem>>, vector<1x4x16xf32>,
    } else {
    }
    %c0 = arith.constant 0 : index
    %c0_1 = arith.constant 0 : index
    %3 = vector.load %arg3[%c0, %c0_1] : memref<4x128xf32, #tpu.memory_space<vmem>>, vector<4x128xf32>
    %c0_2 = arith.constant 0 : index
    %c0_3 = arith.constant 0 : index
    %4 = vector.load %arg4[%c0_2, %c0_3] : memref<4x128xf32, #tpu.memory_space<vmem>>, vector<4x128xf32>
    %c0_4 = arith.constant 0 : index
    %c0_5 = arith.constant 0 : index
    %c0_6 = arith.constant 0 : index
    %5 = vector.load %arg5[%c0_4, %c0_5, %c0_6] : memref<1x4x128xf32, #tpu.memory_space<vmem>>, vector<1x4x128xf32>
    %6 = vector.shape_cast %5 : vector<1x4x128xf32> to vector<4x128xf32>
    %7 = vector.shape_cast %3 : vector<4x128xf32> to vector<1x4x128xf32>
    %8 = vector.shape_cast %6 : vector<4x128xf32> to vector<4x1x128xf32>
    %9 = vector.broadcast %7 : vector<1x4x128xf32> to vector<4x4x128xf32>
    %10 = vector.broadcast %8 : vector<4x1x128xf32> to vector<4x4x128xf32>
    %11 = arith.addf %9, %10 : vector<4x4x128xf32>
    %12 = vector.shape_cast %4 : vector<4x128xf32> to vector<1x4x128xf32>
    %13 = vector.broadcast %12 : vector<1x4x128xf32> to vector<4x4x128xf32>
    %14 = arith.addf %11, %13 : vector<4x4x128xf32>
    %cst = arith.constant 0.000000e+00 : f32
    %15 = vector.broadcast %cst : f32 to vector<4x4x128xf32>
    %16 = arith.maximumf %14, %15 : vector<4x4x128xf32>
    "tpu.trace_start"() <{level = 10 : i32, message = "tbd,tcd->tbc"}> : () -> ()
    %cst_7 = arith.constant dense<0.000000e+00> : vector<4x4x4xf32>
    %17 = tpu.matmul %16, %16, %cst_7 {dimension_numbers = #tpu.dot_dimension_numbers<[2], [2], [1], [1], [0, 0, 0, 1, 1, 1], [0], [0]>} : vector<4x4x128xf32>, vector<4x4x128xf32>, vector<4x4x4xf32> -> vector<4x4x4xf32>
    "tpu.trace_stop"() : () -> ()
    %cst_8 = arith.constant 2.500000e-01 : f32
    %18 = vector.broadcast %cst_8 : f32 to vector<4x4x4xf32>
    %19 = arith.mulf %17, %18 : vector<4x4x4xf32>
    %cst_9 = arith.constant dense<0xFF800000> : vector<4x4xf32>
    %20 = vector.multi_reduction <maximumf>, %19, %cst_9 [2] : vector<4x4x4xf32> to vector<4x4xf32>
    %21 = vector.shape_cast %20 : vector<4x4xf32> to vector<4x4x1xf32>
    %22 = vector.broadcast %21 : vector<4x4x1xf32> to vector<4x4x4xf32>
    %23 = arith.subf %19, %22 : vector<4x4x4xf32>
    %24 = math.exp %23 : vector<4x4x4xf32>
    %cst_10 = arith.constant dense<0.000000e+00> : vector<4x4xf32>
    %25 = vector.multi_reduction <add>, %24, %cst_10 [2] : vector<4x4x4xf32> to vector<4x4xf32>
    %26 = vector.shape_cast %25 : vector<4x4xf32> to vector<4x4x1xf32>
    %cst_11 = arith.constant 1.000000e+00 : f32
    %27 = vector.broadcast %cst_11 : f32 to vector<4x4x1xf32>
    %28 = arith.divf %27, %26 : vector<4x4x1xf32>
    %29 = vector.broadcast %28 : vector<4x4x1xf32> to vector<4x4x4xf32>
    %30 = arith.mulf %24, %29 : vector<4x4x4xf32>
    "tpu.trace_start"() <{level = 10 : i32, message = "tbc,tcd->tbd"}> : () -> ()
    %cst_12 = arith.constant dense<0.000000e+00> : vector<4x4x128xf32>
    %31 = tpu.matmul %30, %16, %cst_12 {dimension_numbers = #tpu.dot_dimension_numbers<[2], [1], [1], [2], [0, 0, 0, 1, 1, 2], [0], [0]>} : vector<4x4x4xf32>, vector<4x4x128xf32>, vector<4x4x128xf32> -> vector<4x4x128xf32>
    "tpu.trace_stop"() : () -> ()
    %32 = vector.shape_cast %3 : vector<4x128xf32> to vector<1x4x128xf32>
    %33 = vector.broadcast %32 : vector<1x4x128xf32> to vector<4x4x128xf32>
    %34 = arith.addf %31, %33 : vector<4x4x128xf32>
    %c0_13 = arith.constant 0 : index
    %c0_14 = arith.constant 0 : index
    %35 = vector.load %arg6[%c0_13, %c0_14] : memref<1x128xf32, #tpu.memory_space<vmem>>, vector<1x128xf32>
    %c0_15 = arith.constant 0 : index
    %c0_16 = arith.constant 0 : index
    %36 = vector.load %arg7[%c0_15, %c0_16] : memref<1x128xf32, #tpu.memory_space<vmem>>, vector<1x128xf32>
    %cst_17 = arith.constant dense<0.000000e+00> : vector<4x4xf32>
    %37 = vector.multi_reduction <add>, %34, %cst_17 [2] : vector<4x4x128xf32> to vector<4x4xf32>
    %38 = vector.shape_cast %37 : vector<4x4xf32> to vector<4x4x1xf32>
    %cst_18 = arith.constant 1.280000e+02 : f32
    %39 = vector.broadcast %cst_18 : f32 to vector<4x4x1xf32>
    %40 = arith.divf %38, %39 : vector<4x4x1xf32>
    %41 = vector.broadcast %40 : vector<4x4x1xf32> to vector<4x4x128xf32>
    %42 = arith.subf %34, %41 : vector<4x4x128xf32>
    %43 = arith.mulf %42, %42 : vector<4x4x128xf32>
    %cst_19 = arith.constant dense<0.000000e+00> : vector<4x4xf32>
    %44 = vector.multi_reduction <add>, %43, %cst_19 [2] : vector<4x4x128xf32> to vector<4x4xf32>
    %45 = vector.shape_cast %44 : vector<4x4xf32> to vector<4x4x1xf32>
    %cst_20 = arith.constant 1.280000e+02 : f32
    %46 = vector.broadcast %cst_20 : f32 to vector<4x4x1xf32>
    %47 = arith.divf %45, %46 : vector<4x4x1xf32>
    %48 = vector.broadcast %40 : vector<4x4x1xf32> to vector<4x4x128xf32>
    %49 = arith.subf %34, %48 : vector<4x4x128xf32>
    %cst_21 = arith.constant 9.99999974E-6 : f32
    %50 = vector.broadcast %cst_21 : f32 to vector<4x4x1xf32>
    %51 = arith.addf %47, %50 : vector<4x4x1xf32>
    %52 = math.rsqrt %51 : vector<4x4x1xf32>
    %53 = vector.broadcast %52 : vector<4x4x1xf32> to vector<4x4x128xf32>
    %54 = arith.mulf %49, %53 : vector<4x4x128xf32>
    %55 = vector.shape_cast %35 : vector<1x128xf32> to vector<1x1x128xf32>
    %56 = vector.broadcast %55 : vector<1x1x128xf32> to vector<4x4x128xf32>
    %57 = arith.mulf %54, %56 : vector<4x4x128xf32>
    %58 = vector.shape_cast %36 : vector<1x128xf32> to vector<1x1x128xf32>
    %59 = vector.broadcast %58 : vector<1x1x128xf32> to vector<4x4x128xf32>
    %60 = arith.addf %57, %59 : vector<4x4x128xf32>
    %61 = vector.shape_cast %60 : vector<4x4x128xf32> to vector<16x128xf32>
    %62 = arith.truncf %61 : vector<16x128xf32> to vector<16x128xbf16>
    %c0_22 = arith.constant 0 : index
    %c0_23 = arith.constant 0 : index
    %63 = vector.load %arg10[%c0_22, %c0_23] : memref<128x512xbf16, #tpu.memory_space<vmem>>, vector<128x512xbf16>
    %cst_24 = arith.constant dense<0.000000e+00> : vector<16x512xf32>
    %64 = tpu.matmul %62, %63, %cst_24 {dimension_numbers = #tpu.dot_dimension_numbers<[1], [0], [0], [1], [0, 0, 1, 1], [], []>} : vector<16x128xbf16>, vector<128x512xbf16>, vector<16x512xf32> -> vector<16x512xf32>
    %c0_25 = arith.constant 0 : index
    %c0_26 = arith.constant 0 : index
    %65 = vector.load %arg11[%c0_25, %c0_26] : memref<1x512xf32, #tpu.memory_space<vmem>>, vector<1x512xf32>
    %66 = vector.broadcast %65 : vector<1x512xf32> to vector<16x512xf32>
    %67 = arith.addf %64, %66 : vector<16x512xf32>
    %cst_27 = arith.constant 0.000000e+00 : f32
    %68 = vector.broadcast %cst_27 : f32 to vector<16x512xf32>
    %69 = arith.maximumf %67, %68 : vector<16x512xf32>
    %70 = arith.truncf %69 : vector<16x512xf32> to vector<16x512xbf16>
    %c0_28 = arith.constant 0 : index
    %c0_29 = arith.constant 0 : index
    %71 = vector.load %arg12[%c0_28, %c0_29] : memref<512x128xbf16, #tpu.memory_space<vmem>>, vector<512x128xbf16>
    %cst_30 = arith.constant dense<0.000000e+00> : vector<16x128xf32>
    %72 = tpu.matmul %70, %71, %cst_30 {dimension_numbers = #tpu.dot_dimension_numbers<[1], [0], [0], [1], [0, 0, 1, 1], [], []>} : vector<16x512xbf16>, vector<512x128xbf16>, vector<16x128xf32> -> vector<16x128xf32>
    %c0_31 = arith.constant 0 : index
    %c0_32 = arith.constant 0 : index
    %73 = vector.load %arg13[%c0_31, %c0_32] : memref<1x128xf32, #tpu.memory_space<vmem>>, vector<1x128xf32>
    %74 = vector.broadcast %73 : vector<1x128xf32> to vector<16x128xf32>
    %75 = arith.addf %72, %74 : vector<16x128xf32>
    %c0_33 = arith.constant 0 : index
    %c0_34 = arith.constant 0 : index
    %76 = vector.load %arg8[%c0_33, %c0_34] : memref<1x128xf32, #tpu.memory_space<vmem>>, vector<1x128xf32>
    %c0_35 = arith.constant 0 : index
    %c0_36 = arith.constant 0 : index
    %77 = vector.load %arg9[%c0_35, %c0_36] : memref<1x128xf32, #tpu.memory_space<vmem>>, vector<1x128xf32>
    %cst_37 = arith.constant dense<0.000000e+00> : vector<16xf32>
    %78 = vector.multi_reduction <add>, %61, %cst_37 [1] : vector<16x128xf32> to vector<16xf32>
    %79 = vector.shape_cast %78 : vector<16xf32> to vector<16x1xf32>
    %cst_38 = arith.constant 1.280000e+02 : f32
    %80 = vector.broadcast %cst_38 : f32 to vector<16x1xf32>
    %81 = arith.divf %79, %80 : vector<16x1xf32>
    %82 = vector.broadcast %81 : vector<16x1xf32> to vector<16x128xf32>
    %83 = arith.subf %61, %82 : vector<16x128xf32>
    %84 = arith.mulf %83, %83 : vector<16x128xf32>
    %cst_39 = arith.constant dense<0.000000e+00> : vector<16xf32>
    %85 = vector.multi_reduction <add>, %84, %cst_39 [1] : vector<16x128xf32> to vector<16xf32>
    %86 = vector.shape_cast %85 : vector<16xf32> to vector<16x1xf32>
    %cst_40 = arith.constant 1.280000e+02 : f32
    %87 = vector.broadcast %cst_40 : f32 to vector<16x1xf32>
    %88 = arith.divf %86, %87 : vector<16x1xf32>
    %89 = vector.broadcast %81 : vector<16x1xf32> to vector<16x128xf32>
    %90 = arith.subf %61, %89 : vector<16x128xf32>
    %cst_41 = arith.constant 9.99999974E-6 : f32
    %91 = vector.broadcast %cst_41 : f32 to vector<16x1xf32>
    %92 = arith.addf %88, %91 : vector<16x1xf32>
    %93 = math.rsqrt %92 : vector<16x1xf32>
    %94 = vector.broadcast %93 : vector<16x1xf32> to vector<16x128xf32>
    %95 = arith.mulf %90, %94 : vector<16x128xf32>
    %96 = vector.broadcast %76 : vector<1x128xf32> to vector<16x128xf32>
    %97 = arith.mulf %95, %96 : vector<16x128xf32>
    %98 = vector.broadcast %77 : vector<1x128xf32> to vector<16x128xf32>
    %99 = arith.addf %97, %98 : vector<16x128xf32>
    %100 = arith.addf %75, %99 : vector<16x128xf32>
    %101 = arith.truncf %100 : vector<16x128xf32> to vector<16x128xbf16>
    %c0_42 = arith.constant 0 : index
    %c0_43 = arith.constant 0 : index
    %102 = vector.load %arg14[%c0_42, %c0_43] : memref<128x16xbf16, #tpu.memory_space<vmem>>, vector<128x16xbf16>
    %cst_44 = arith.constant dense<0.000000e+00> : vector<16x16xf32>
    %103 = tpu.matmul %101, %102, %cst_44 {dimension_numbers = #tpu.dot_dimension_numbers<[1], [0], [0], [1], [0, 0, 1, 1], [], []>} : vector<16x128xbf16>, vector<128x16xbf16>, vector<16x16xf32> -> vector<16x16xf32>
    %c0_45 = arith.constant 0 : index
    %c0_46 = arith.constant 0 : index
    %104 = vector.load %arg15[%c0_45, %c0_46] : memref<1x16xf32, #tpu.memory_space<vmem>>, vector<1x16xf32>
    %105 = vector.broadcast %104 : vector<1x16xf32> to vector<16x16xf32>
    %106 = arith.addf %103, %105 : vector<16x16xf32>
    %cst_47 = arith.constant 0.000000e+00 : f32
    %107 = vector.broadcast %cst_47 : f32 to vector<16x16xf32>
    %108 = arith.maximumf %106, %107 : vector<16x16xf32>
    %109 = vector.shape_cast %108 : vector<16x16xf32> to vector<4x4x16xf32>
    %c0_48 = arith.constant 0 : index
    %c0_49 = arith.constant 0 : index
    %c0_50 = arith.constant 0 : index
    %110 = vector.load %arg16[%c0_48, %c0_49, %c0_50] : memref<1x4x16xf32, #tpu.memory_space<vmem>>, vector<1x4x16xf32>
    %cst_51 = arith.constant dense<0.000000e+00> : vector<4x16xf32>
    %111 = vector.multi_reduction <add>, %109, %cst_51 [0] : vector<4x4x16xf32> to vector<4x16xf32>
    %112 = vector.shape_cast %111 : vector<4x16xf32> to vector<1x4x16xf32>
    %113 = arith.addf %110, %112 : vector<1x4x16xf32>
    %c0_52 = arith.constant 0 : index
    %c0_53 = arith.constant 0 : index
    %c0_54 = arith.constant 0 : index
    %114 = vector.load %arg16[%c0_52, %c0_53, %c0_54] : memref<1x4x16xf32, #tpu.memory_space<vmem>>, vector<1x4x16xf32>
    tpu.vector_store %arg16[%c0_52, %c0_53, %c0_54], %113 {strides = array<i32>} : memref<1x4x16xf32, #tpu.memory_space<vmem>>, vector<1x4x16xf32>,
    return
  }
  func.func @transform_0(%arg0: i32, %arg1: i32, %arg2: memref<1xi32, #tpu.memory_space<smem>>) -> (i32, i32) {
    %c0_i32 = arith.constant 0 : i32
    %c0_i32_0 = arith.constant 0 : i32
    %c0_i32_1 = arith.constant 0 : i32
    return %c0_i32, %c0_i32_0 : i32, i32
  }
  func.func @transform_1(%arg0: i32, %arg1: i32, %arg2: memref<1xi32, #tpu.memory_space<smem>>) -> (i32, i32) {
    %c0_i32 = arith.constant 0 : i32
    %c0_i32_0 = arith.constant 0 : i32
    %c0_i32_1 = arith.constant 0 : i32
    return %c0_i32, %c0_i32_0 : i32, i32
  }
  func.func @transform_2(%arg0: i32, %arg1: i32, %arg2: memref<1xi32, #tpu.memory_space<smem>>) -> (i32, i32, i32) {
    %c1_i32 = arith.constant 1 : i32
    %0 = arith.muli %arg0, %c1_i32 : i32
    %1 = arith.addi %0, %arg1 : i32
    %c0_i32 = arith.constant 0 : i32
    %c0_i32_0 = arith.constant 0 : i32
    %c0_i32_1 = arith.constant 0 : i32
    return %1, %c0_i32, %c0_i32_0 : i32, i32, i32
  }
  func.func @transform_3(%arg0: i32, %arg1: i32, %arg2: memref<1xi32, #tpu.memory_space<smem>>) -> (i32, i32) {
    %c0_i32 = arith.constant 0 : i32
    %c0_i32_0 = arith.constant 0 : i32
    %c0_i32_1 = arith.constant 0 : i32
    return %c0_i32, %c0_i32_0 : i32, i32
  }
  func.func @transform_4(%arg0: i32, %arg1: i32, %arg2: memref<1xi32, #tpu.memory_space<smem>>) -> (i32, i32) {
    %c0_i32 = arith.constant 0 : i32
    %c0_i32_0 = arith.constant 0 : i32
    %c0_i32_1 = arith.constant 0 : i32
    return %c0_i32, %c0_i32_0 : i32, i32
  }
  func.func @transform_5(%arg0: i32, %arg1: i32, %arg2: memref<1xi32, #tpu.memory_space<smem>>) -> (i32, i32) {
    %c0_i32 = arith.constant 0 : i32
    %c0_i32_0 = arith.constant 0 : i32
    %c0_i32_1 = arith.constant 0 : i32
    return %c0_i32, %c0_i32_0 : i32, i32
  }
  func.func @transform_6(%arg0: i32, %arg1: i32, %arg2: memref<1xi32, #tpu.memory_space<smem>>) -> (i32, i32) {
    %c0_i32 = arith.constant 0 : i32
    %c0_i32_0 = arith.constant 0 : i32
    %c0_i32_1 = arith.constant 0 : i32
    return %c0_i32, %c0_i32_0 : i32, i32
  }
  func.func @transform_7(%arg0: i32, %arg1: i32, %arg2: memref<1xi32, #tpu.memory_space<smem>>) -> (i32, i32) {
    %c0_i32 = arith.constant 0 : i32
    %c0_i32_0 = arith.constant 0 : i32
    %c0_i32_1 = arith.constant 0 : i32
    return %c0_i32, %c0_i32_0 : i32, i32
  }
  func.func @transform_8(%arg0: i32, %arg1: i32, %arg2: memref<1xi32, #tpu.memory_space<smem>>) -> (i32, i32) {
    %c0_i32 = arith.constant 0 : i32
    %c0_i32_0 = arith.constant 0 : i32
    %c0_i32_1 = arith.constant 0 : i32
    return %c0_i32, %c0_i32_0 : i32, i32
  }
  func.func @transform_9(%arg0: i32, %arg1: i32, %arg2: memref<1xi32, #tpu.memory_space<smem>>) -> (i32, i32) {
    %c0_i32 = arith.constant 0 : i32
    %c0_i32_0 = arith.constant 0 : i32
    %c0_i32_1 = arith.constant 0 : i32
    return %c0_i32, %c0_i32_0 : i32, i32
  }
  func.func @transform_10(%arg0: i32, %arg1: i32, %arg2: memref<1xi32, #tpu.memory_space<smem>>) -> (i32, i32) {
    %c0_i32 = arith.constant 0 : i32
    %c0_i32_0 = arith.constant 0 : i32
    %c0_i32_1 = arith.constant 0 : i32
    return %c0_i32, %c0_i32_0 : i32, i32
  }
  func.func @transform_11(%arg0: i32, %arg1: i32, %arg2: memref<1xi32, #tpu.memory_space<smem>>) -> (i32, i32) {
    %c0_i32 = arith.constant 0 : i32
    %c0_i32_0 = arith.constant 0 : i32
    %c0_i32_1 = arith.constant 0 : i32
    return %c0_i32, %c0_i32_0 : i32, i32
  }
  func.func @transform_12(%arg0: i32, %arg1: i32, %arg2: memref<1xi32, #tpu.memory_space<smem>>) -> (i32, i32) {
    %c0_i32 = arith.constant 0 : i32
    %c0_i32_0 = arith.constant 0 : i32
    %c0_i32_1 = arith.constant 0 : i32
    return %c0_i32, %c0_i32_0 : i32, i32
  }
  func.func @transform_13(%arg0: i32, %arg1: i32, %arg2: memref<1xi32, #tpu.memory_space<smem>>) -> (i32, i32, i32) {
    %c0_i32 = arith.constant 0 : i32
    %c0_i32_0 = arith.constant 0 : i32
    %c0_i32_1 = arith.constant 0 : i32
    return %arg0, %c0_i32, %c0_i32_0 : i32, i32, i32
  }
}

</mosaic_0001>

<llo_original>
// kernel: encoder_sparse_forward.1
$region0: #{encoder_sparse_forward.1}
  #allocation0 [shape = 'u32[]', space=smem, size = 0x4, offset = 0x4, fixed_abs, tag = 'smem constant byte address 0x4 - core index']
  #allocation1 [shape = 'u32[144,128]{1,0:T(1,128)}', space=vmem, size = 0x12000, scoped, tag = 'internal scratch']
  #allocation2 [shape = 's32[1]{0}', space=sflag, size = 0x4, scoped, tag = 'scoped memory for encoder_sparse_forward.1']
  #allocation3 [shape = 's32[1]{0:T(128)S(6)}', space=smem, size = 0x200, scoped, tag = 'prefetched SMEM operand 0']
  %s0 = inlined_call_operand.<no memory space> [shape: s32[1], index: 0, kind: input, shape index: {}]
  %s1 = inlined_call_operand.vmem [shape: f32[4,128], index: 1, kind: input, shape index: {}]
  %s2 = inlined_call_operand.vmem [shape: f32[4,128], index: 2, kind: input, shape index: {}]
  %s3 = inlined_call_operand.vmem [shape: f32[1,4,128], index: 3, kind: input, shape index: {}]
  %s4 = inlined_call_operand.vmem [shape: f32[1,128], index: 4, kind: input, shape index: {}]
  %s5 = inlined_call_operand.vmem [shape: f32[1,128], index: 5, kind: input, shape index: {}]
  %s6 = inlined_call_operand.vmem [shape: f32[1,128], index: 6, kind: input, shape index: {}]
  %s7 = inlined_call_operand.vmem [shape: f32[1,128], index: 7, kind: input, shape index: {}]
  %s8 = inlined_call_operand.vmem [shape: bf16[128,512], index: 8, kind: input, shape index: {}]
  %s9 = inlined_call_operand.vmem [shape: f32[1,512], index: 9, kind: input, shape index: {}]
  %s10 = inlined_call_operand.vmem [shape: bf16[512,128], index: 10, kind: input, shape index: {}]
  %s11 = inlined_call_operand.vmem [shape: f32[1,128], index: 11, kind: input, shape index: {}]
  %s12 = inlined_call_operand.vmem [shape: bf16[128,16], index: 12, kind: input, shape index: {}]
  %s13 = inlined_call_operand.vmem [shape: f32[1,16], index: 13, kind: input, shape index: {}]
  %s14 = inlined_call_operand.vmem [shape: f32[1,4,16], index: 14, kind: output, shape index: {}]
  %s15 = sld [smem:[#allocation0]]
  $region66: #{encoder_sparse_forward.1} parent=0
    _
  %s17 = ssub.s32 1, %s15
  %s18 = scalar_select 0, %s17, %s15
  %19 = sst [smem:[#allocation3]] %s0
  // Predicated region
  $region2: #{encoder_sparse_forward.1} parent=0 // pred_check
    _
  $region3: #{encoder_sparse_forward.1} parent=0 // pred_check_branch
    %21 = sbr.rel (0) target = $region5
  $region4: #{encoder_sparse_forward.1} parent=0 // pred_region
    _
  $region5: #{encoder_sparse_forward.1} parent=0 // pred_fallthru
    _
  // Predicated region
  $region6: #{encoder_sparse_forward.1} parent=0 // pred_check
    _
  $region7: #{encoder_sparse_forward.1} parent=0 // pred_check_branch
    %23 = sbr.rel (0) target = $region9
  $region8: #{encoder_sparse_forward.1} parent=0 // pred_region
    _
  $region9: #{encoder_sparse_forward.1} parent=0 // pred_fallthru
    _
  // Predicated region
  $region10: #{encoder_sparse_forward.1} parent=0 // pred_check
    _
  $region11: #{encoder_sparse_forward.1} parent=0 // pred_check_branch
    %25 = sbr.rel (0) target = $region13
  $region12: #{encoder_sparse_forward.1} parent=0 // pred_region
    %s26 = sadd.s32 0, 0
    %p27 = scmp.lt.s32.totalorder %s26, 0
    %s28 = scalar_select %p27, %s26, 0
    %s29 = smul.addr %s28, 4
    %s30 = scalar_lea.vmem %s3, %s29
    %s31 = sadd.s32 0, 0
  $region13: #{encoder_sparse_forward.1} parent=0 // pred_fallthru
    _
  // Predicated region
  $region14: #{encoder_sparse_forward.1} parent=0 // pred_check
    _
  $region15: #{encoder_sparse_forward.1} parent=0 // pred_check_branch
    %33 = sbr.rel (0) target = $region17
  $region16: #{encoder_sparse_forward.1} parent=0 // pred_region
    _
  $region17: #{encoder_sparse_forward.1} parent=0 // pred_fallthru
    _
  // Predicated region
  $region18: #{encoder_sparse_forward.1} parent=0 // pred_check
    _
  $region19: #{encoder_sparse_forward.1} parent=0 // pred_check_branch
    %35 = sbr.rel (0) target = $region21
  $region20: #{encoder_sparse_forward.1} parent=0 // pred_region
    _
  $region21: #{encoder_sparse_forward.1} parent=0 // pred_fallthru
    _
  // Predicated region
  $region22: #{encoder_sparse_forward.1} parent=0 // pred_check
    _
  $region23: #{encoder_sparse_forward.1} parent=0 // pred_check_branch
    %37 = sbr.rel (0) target = $region25
  $region24: #{encoder_sparse_forward.1} parent=0 // pred_region
    _
  $region25: #{encoder_sparse_forward.1} parent=0 // pred_fallthru
    _
  // Predicated region
  $region26: #{encoder_sparse_forward.1} parent=0 // pred_check
    _
  $region27: #{encoder_sparse_forward.1} parent=0 // pred_check_branch
    %39 = sbr.rel (0) target = $region29
  $region28: #{encoder_sparse_forward.1} parent=0 // pred_region
    _
  $region29: #{encoder_sparse_forward.1} parent=0 // pred_fallthru
    _
  // Predicated region
  $region30: #{encoder_sparse_forward.1} parent=0 // pred_check
    _
  $region31: #{encoder_sparse_forward.1} parent=0 // pred_check_branch
    %41 = sbr.rel (0) target = $region33
  $region32: #{encoder_sparse_forward.1} parent=0 // pred_region
    _
  $region33: #{encoder_sparse_forward.1} parent=0 // pred_fallthru
    _
  // Predicated region
  $region34: #{encoder_sparse_forward.1} parent=0 // pred_check
    _
  $region35: #{encoder_sparse_forward.1} parent=0 // pred_check_branch
    %43 = sbr.rel (0) target = $region37
  $region36: #{encoder_sparse_forward.1} parent=0 // pred_region
    _
  $region37: #{encoder_sparse_forward.1} parent=0 // pred_fallthru
    _
  // Predicated region
  $region38: #{encoder_sparse_forward.1} parent=0 // pred_check
    _
  $region39: #{encoder_sparse_forward.1} parent=0 // pred_check_branch
    %45 = sbr.rel (0) target = $region41
  $region40: #{encoder_sparse_forward.1} parent=0 // pred_region
    _
  $region41: #{encoder_sparse_forward.1} parent=0 // pred_fallthru
    _
  // Predicated region
  $region42: #{encoder_sparse_forward.1} parent=0 // pred_check
    _
  $region43: #{encoder_sparse_forward.1} parent=0 // pred_check_branch
    %47 = sbr.rel (0) target = $region45
  $region44: #{encoder_sparse_forward.1} parent=0 // pred_region
    _
  $region45: #{encoder_sparse_forward.1} parent=0 // pred_fallthru
    _
  // Predicated region
  $region46: #{encoder_sparse_forward.1} parent=0 // pred_check
    _
  $region47: #{encoder_sparse_forward.1} parent=0 // pred_check_branch
    %49 = sbr.rel (0) target = $region49
  $region48: #{encoder_sparse_forward.1} parent=0 // pred_region
    _
  $region49: #{encoder_sparse_forward.1} parent=0 // pred_fallthru
    _
  // Predicated region
  $region50: #{encoder_sparse_forward.1} parent=0 // pred_check
    _
  $region51: #{encoder_sparse_forward.1} parent=0 // pred_check_branch
    %51 = sbr.rel (0) target = $region53
  $region52: #{encoder_sparse_forward.1} parent=0 // pred_region
    _
  $region53: #{encoder_sparse_forward.1} parent=0 // pred_fallthru
    _
  %s52 = sadd.s32 0, 0
  %p53 = scmp.lt.s32.totalorder %s52, 0
  %s54 = scalar_select %p53, %s52, 0
  %s55 = smul.addr %s54, 4
  %s56 = scalar_lea.vmem %s3, %s55
  %s57 = sadd.s32 0, 0
  %p58 = scmp.lt.s32.totalorder %s57, 0
  %s59 = scalar_select %p58, %s57, 0
  %s60 = smul.addr %s59, 4
  %s61 = scalar_lea.vmem %s3, %s60
  %s62 = sadd.s32 0, 0
  %p64 = scmp.eq.s32.totalorder 0, 0
  // Predicated region
  $region54: #{encoder_sparse_forward.1} parent=0 // pred_check
    %p65 = pneg %p64
  $region55: #{encoder_sparse_forward.1} parent=0 // pred_check_branch
    %67 = sbr.rel (%p65) target = $region57
  $region56: #{encoder_sparse_forward.1} parent=0 // pred_region
    %vm68 = vcmask 125952
    %69 = vst.msk [vmem:[%s14] sm:$0xf] %vm68, 0.0
  $region57: #{encoder_sparse_forward.1} parent=0 // pred_fallthru
    _
  %v70 = vld [vmem:[%s1] sm:$0xf]
  %v71 = vld [vmem:[%s2] sm:$0xf]
  %v72 = vld [vmem:[%s61] sm:$0xf]
  %v75 = vunpack.c.l.s4 1966171168
  %v76 = vunpack.c.0.s8 %v75
  %v77 = vlaneseq
  %v78 = vshrl.u32 %v77, 7
  %v79 = vsub.s32 %v76, %v78
  %v80 = vrot.slane %v72, %v79
  %v81 = vcombine.high %v80, %v80
  %v83 = vunpack.c.l.s4 1966171168
  %v84 = vunpack.c.0.s8 %v83
  %v85 = vlaneseq
  %v86 = vshrl.u32 %v85, 7
  %v87 = vsub.s32 %v84, %v86
  %v88 = vrot.slane %v80, %v87
  %v90 = vunpack.c.l.s4 1966171168
  %v91 = vunpack.c.0.s8 %v90
  %v92 = vlaneseq
  %v93 = vshrl.u32 %v92, 7
  %v94 = vsub.s32 %v91, %v93
  %v95 = vrot.slane %v81, %v94
  %v96 = vcombine.high %v88, %v88
  %v97 = vcombine.high %v95, %v95
  %v98 = vlaneseq
  %v99 = vshrl.u32 %v98, 7
  %v100 = vsub.s32 0, %v99
  %v101 = vrot.slane %v88, %v100
  %v102 = vlaneseq
  %v103 = vshrl.u32 %v102, 7
  %v104 = vsub.s32 0, %v103
  %v105 = vrot.slane %v95, %v104
  %v106 = vlaneseq
  %v107 = vshrl.u32 %v106, 7
  %v108 = vsub.s32 0, %v107
  %v109 = vrot.slane %v96, %v108
  %v110 = vlaneseq
  %v111 = vshrl.u32 %v110, 7
  %v112 = vsub.s32 0, %v111
  %v113 = vrot.slane %v97, %v112
  %v118 = vadd.f32 %v70, %v101
  %v119 = vadd.f32 %v70, %v105
  %v120 = vadd.f32 %v70, %v109
  %v121 = vadd.f32 %v70, %v113
  %v122 = vadd.f32 %v118, %v71
  %v123 = vadd.f32 %v119, %v71
  %v124 = vadd.f32 %v120, %v71
  %v125 = vadd.f32 %v121, %v71
  %v126 = vmax.f32 %v122, 0.0
  %v127 = vmax.f32 %v123, 0.0
  %v128 = vmax.f32 %v124, 0.0
  %v129 = vmax.f32 %v125, 0.0
  %130 = vmatprep.subr.mxu0 0.0
  %131 = vmatpush1.xpose.msra.mxu0 0.0
  %132 = vmatprep.subr.mxu0 0.0
  %133 = vmatpush1.xpose.msra.mxu0 0.0
  %134 = vmatprep.subr.mxu0 0.0
  %135 = vmatpush1.xpose.msra.mxu0 0.0
  %136 = vmatprep.subr.mxu0 0.0
  %137 = vmatpush1.xpose.msra.mxu0 0.0
  %138 = vmatprep.subr.mxu0 0.0
  %139 = vmatpush1.xpose.msra.mxu0 0.0
  %140 = vmatprep.subr.mxu0 0.0
  %141 = vmatpush1.xpose.msra.mxu0 0.0
  %142 = vmatprep.subr.mxu0 0.0
  %143 = vmatpush1.xpose.msra.mxu0 0.0
  %144 = vmatprep.subr.mxu0 0.0
  %145 = vmatpush1.xpose.msra.mxu0 0.0
  %146 = vmatprep.subr.mxu0 0.0
  %147 = vmatpush1.xpose.msra.mxu0 0.0
  %148 = vmatprep.subr.mxu0 0.0
  %149 = vmatpush1.xpose.msra.mxu0 0.0
  %150 = vmatprep.subr.mxu0 0.0
  %151 = vmatpush1.xpose.msra.mxu0 0.0
  %152 = vmatprep.subr.mxu0 0.0
  %153 = vmatpush1.xpose.msra.mxu0 0.0
  %154 = vmatprep.subr.mxu0 0.0
  %155 = vmatpush1.xpose.msra.mxu0 0.0
  %156 = vmatprep.subr.mxu0 0.0
  %157 = vmatpush1.xpose.msra.mxu0 0.0
  %158 = vmatprep.subr.mxu0 0.0
  %159 = vmatpush1.xpose.msra.mxu0 0.0
  %160 = vmatprep.subr.mxu0 0.0
  %161 = vmatpush1.xpose.msra.mxu0 %v126
  %162 = vmatprep.subr.mxu0 0.0
  %163 = vmatpush2.xpose.msra.mxu0 0.0
  %164 = vmatprep.subr.mxu0 0.0
  %165 = vmatpush2.xpose.msra.mxu0 0.0
  %166 = vmatprep.subr.mxu0 0.0
  %167 = vmatpush2.xpose.msra.mxu0 0.0
  %168 = vmatprep.subr.mxu0 0.0
  %169 = vmatpush2.xpose.msra.mxu0 0.0
  %170 = vmatprep.subr.mxu0 0.0
  %171 = vmatpush2.xpose.msra.mxu0 0.0
  %172 = vmatprep.subr.mxu0 0.0
  %173 = vmatpush2.xpose.msra.mxu0 0.0
  %174 = vmatprep.subr.mxu0 0.0
  %175 = vmatpush2.xpose.msra.mxu0 0.0
  %176 = vmatprep.subr.mxu0 0.0
  %177 = vmatpush2.xpose.msra.mxu0 0.0
  %178 = vmatprep.subr.mxu0 0.0
  %179 = vmatpush2.xpose.msra.mxu0 0.0
  %180 = vmatprep.subr.mxu0 0.0
  %181 = vmatpush2.xpose.msra.mxu0 0.0
  %182 = vmatprep.subr.mxu0 0.0
  %183 = vmatpush2.xpose.msra.mxu0 0.0
  %184 = vmatprep.subr.mxu0 0.0
  %185 = vmatpush2.xpose.msra.mxu0 0.0
  %186 = vmatprep.subr.mxu0 0.0
  %187 = vmatpush2.xpose.msra.mxu0 0.0
  %188 = vmatprep.subr.mxu0 0.0
  %189 = vmatpush2.xpose.msra.mxu0 0.0
  %190 = vmatprep.subr.mxu0 0.0
  %191 = vmatpush2.xpose.msra.mxu0 0.0
  %192 = vmatprep.subr.mxu0 0.0
  %193 = vmatpush2.xpose.msra.mxu0 0.0
  %194 = vmatprep.mubr.f32.mxu0 0.0
  %195 = vmatmul.mubr.f32.gmra.mxu0 %v126
  %v196 = vpop.f32.mrf.mxu0
  %v197 = vadd.f32 0.0, %v196
  %v198 = vpop.f32.mrf.mxu0
  %199 = vdwg.mxu0
  %200 = vmatprep.subr.mxu0 0.0
  %201 = vmatpush1.xpose.msra.mxu0 0.0
  %202 = vmatprep.subr.mxu0 0.0
  %203 = vmatpush1.xpose.msra.mxu0 0.0
  %204 = vmatprep.subr.mxu0 0.0
  %205 = vmatpush1.xpose.msra.mxu0 0.0
  %206 = vmatprep.subr.mxu0 0.0
  %207 = vmatpush1.xpose.msra.mxu0 0.0
  %208 = vmatprep.subr.mxu0 0.0
  %209 = vmatpush1.xpose.msra.mxu0 0.0
  %210 = vmatprep.subr.mxu0 0.0
  %211 = vmatpush1.xpose.msra.mxu0 0.0
  %212 = vmatprep.subr.mxu0 0.0
  %213 = vmatpush1.xpose.msra.mxu0 0.0
  %214 = vmatprep.subr.mxu0 0.0
  %215 = vmatpush1.xpose.msra.mxu0 0.0
  %216 = vmatprep.subr.mxu0 0.0
  %217 = vmatpush1.xpose.msra.mxu0 0.0
  %218 = vmatprep.subr.mxu0 0.0
  %219 = vmatpush1.xpose.msra.mxu0 0.0
  %220 = vmatprep.subr.mxu0 0.0
  %221 = vmatpush1.xpose.msra.mxu0 0.0
  %222 = vmatprep.subr.mxu0 0.0
  %223 = vmatpush1.xpose.msra.mxu0 0.0
  %224 = vmatprep.subr.mxu0 0.0
  %225 = vmatpush1.xpose.msra.mxu0 0.0
  %226 = vmatprep.subr.mxu0 0.0
  %227 = vmatpush1.xpose.msra.mxu0 0.0
  %228 = vmatprep.subr.mxu0 0.0
  %229 = vmatpush1.xpose.msra.mxu0 0.0
  %230 = vmatprep.subr.mxu0 0.0
  %231 = vmatpush1.xpose.msra.mxu0 %v127
  %232 = vmatprep.subr.mxu0 0.0
  %233 = vmatpush2.xpose.msra.mxu0 0.0
  %234 = vmatprep.subr.mxu0 0.0
  %235 = vmatpush2.xpose.msra.mxu0 0.0
  %236 = vmatprep.subr.mxu0 0.0
  %237 = vmatpush2.xpose.msra.mxu0 0.0
  %238 = vmatprep.subr.mxu0 0.0
  %239 = vmatpush2.xpose.msra.mxu0 0.0
  %240 = vmatprep.subr.mxu0 0.0
  %241 = vmatpush2.xpose.msra.mxu0 0.0
  %242 = vmatprep.subr.mxu0 0.0
  %243 = vmatpush2.xpose.msra.mxu0 0.0
  %244 = vmatprep.subr.mxu0 0.0
  %245 = vmatpush2.xpose.msra.mxu0 0.0
  %246 = vmatprep.subr.mxu0 0.0
  %247 = vmatpush2.xpose.msra.mxu0 0.0
  %248 = vmatprep.subr.mxu0 0.0
  %249 = vmatpush2.xpose.msra.mxu0 0.0
  %250 = vmatprep.subr.mxu0 0.0
  %251 = vmatpush2.xpose.msra.mxu0 0.0
  %252 = vmatprep.subr.mxu0 0.0
  %253 = vmatpush2.xpose.msra.mxu0 0.0
  %254 = vmatprep.subr.mxu0 0.0
  %255 = vmatpush2.xpose.msra.mxu0 0.0
  %256 = vmatprep.subr.mxu0 0.0
  %257 = vmatpush2.xpose.msra.mxu0 0.0
  %258 = vmatprep.subr.mxu0 0.0
  %259 = vmatpush2.xpose.msra.mxu0 0.0
  %260 = vmatprep.subr.mxu0 0.0
  %261 = vmatpush2.xpose.msra.mxu0 0.0
  %262 = vmatprep.subr.mxu0 0.0
  %263 = vmatpush2.xpose.msra.mxu0 0.0
  %264 = vmatprep.mubr.f32.mxu0 0.0
  %265 = vmatmul.mubr.f32.gmra.mxu0 %v127
  %v266 = vpop.f32.mrf.mxu0
  %v267 = vadd.f32 0.0, %v266
  %v268 = vpop.f32.mrf.mxu0
  %269 = vdwg.mxu0
  %270 = vmatprep.subr.mxu0 0.0
  %271 = vmatpush1.xpose.msra.mxu0 0.0
  %272 = vmatprep.subr.mxu0 0.0
  %273 = vmatpush1.xpose.msra.mxu0 0.0
  %274 = vmatprep.subr.mxu0 0.0
  %275 = vmatpush1.xpose.msra.mxu0 0.0
  %276 = vmatprep.subr.mxu0 0.0
  %277 = vmatpush1.xpose.msra.mxu0 0.0
  %278 = vmatprep.subr.mxu0 0.0
  %279 = vmatpush1.xpose.msra.mxu0 0.0
  %280 = vmatprep.subr.mxu0 0.0
  %281 = vmatpush1.xpose.msra.mxu0 0.0
  %282 = vmatprep.subr.mxu0 0.0
  %283 = vmatpush1.xpose.msra.mxu0 0.0
  %284 = vmatprep.subr.mxu0 0.0
  %285 = vmatpush1.xpose.msra.mxu0 0.0
  %286 = vmatprep.subr.mxu0 0.0
  %287 = vmatpush1.xpose.msra.mxu0 0.0
  %288 = vmatprep.subr.mxu0 0.0
  %289 = vmatpush1.xpose.msra.mxu0 0.0
  %290 = vmatprep.subr.mxu0 0.0
  %291 = vmatpush1.xpose.msra.mxu0 0.0
  %292 = vmatprep.subr.mxu0 0.0
  %293 = vmatpush1.xpose.msra.mxu0 0.0
  %294 = vmatprep.subr.mxu0 0.0
  %295 = vmatpush1.xpose.msra.mxu0 0.0
  %296 = vmatprep.subr.mxu0 0.0
  %297 = vmatpush1.xpose.msra.mxu0 0.0
  %298 = vmatprep.subr.mxu0 0.0
  %299 = vmatpush1.xpose.msra.mxu0 0.0
  %300 = vmatprep.subr.mxu0 0.0
  %301 = vmatpush1.xpose.msra.mxu0 %v128
  %302 = vmatprep.subr.mxu0 0.0
  %303 = vmatpush2.xpose.msra.mxu0 0.0
  %304 = vmatprep.subr.mxu0 0.0
  %305 = vmatpush2.xpose.msra.mxu0 0.0
  %306 = vmatprep.subr.mxu0 0.0
  %307 = vmatpush2.xpose.msra.mxu0 0.0
  %308 = vmatprep.subr.mxu0 0.0
  %309 = vmatpush2.xpose.msra.mxu0 0.0
  %310 = vmatprep.subr.mxu0 0.0
  %311 = vmatpush2.xpose.msra.mxu0 0.0
  %312 = vmatprep.subr.mxu0 0.0
  %313 = vmatpush2.xpose.msra.mxu0 0.0
  %314 = vmatprep.subr.mxu0 0.0
  %315 = vmatpush2.xpose.msra.mxu0 0.0
  %316 = vmatprep.subr.mxu0 0.0
  %317 = vmatpush2.xpose.msra.mxu0 0.0
  %318 = vmatprep.subr.mxu0 0.0
  %319 = vmatpush2.xpose.msra.mxu0 0.0
  %320 = vmatprep.subr.mxu0 0.0
  %321 = vmatpush2.xpose.msra.mxu0 0.0
  %322 = vmatprep.subr.mxu0 0.0
  %323 = vmatpush2.xpose.msra.mxu0 0.0
  %324 = vmatprep.subr.mxu0 0.0
  %325 = vmatpush2.xpose.msra.mxu0 0.0
  %326 = vmatprep.subr.mxu0 0.0
  %327 = vmatpush2.xpose.msra.mxu0 0.0
  %328 = vmatprep.subr.mxu0 0.0
  %329 = vmatpush2.xpose.msra.mxu0 0.0
  %330 = vmatprep.subr.mxu0 0.0
  %331 = vmatpush2.xpose.msra.mxu0 0.0
  %332 = vmatprep.subr.mxu0 0.0
  %333 = vmatpush2.xpose.msra.mxu0 0.0
  %334 = vmatprep.mubr.f32.mxu0 0.0
  %335 = vmatmul.mubr.f32.gmra.mxu0 %v128
  %v336 = vpop.f32.mrf.mxu0
  %v337 = vadd.f32 0.0, %v336
  %v338 = vpop.f32.mrf.mxu0
  %339 = vdwg.mxu0
  %340 = vmatprep.subr.mxu0 0.0
  %341 = vmatpush1.xpose.msra.mxu0 0.0
  %342 = vmatprep.subr.mxu0 0.0
  %343 = vmatpush1.xpose.msra.mxu0 0.0
  %344 = vmatprep.subr.mxu0 0.0
  %345 = vmatpush1.xpose.msra.mxu0 0.0
  %346 = vmatprep.subr.mxu0 0.0
  %347 = vmatpush1.xpose.msra.mxu0 0.0
  %348 = vmatprep.subr.mxu0 0.0
  %349 = vmatpush1.xpose.msra.mxu0 0.0
  %350 = vmatprep.subr.mxu0 0.0
  %351 = vmatpush1.xpose.msra.mxu0 0.0
  %352 = vmatprep.subr.mxu0 0.0
  %353 = vmatpush1.xpose.msra.mxu0 0.0
  %354 = vmatprep.subr.mxu0 0.0
  %355 = vmatpush1.xpose.msra.mxu0 0.0
  %356 = vmatprep.subr.mxu0 0.0
  %357 = vmatpush1.xpose.msra.mxu0 0.0
  %358 = vmatprep.subr.mxu0 0.0
  %359 = vmatpush1.xpose.msra.mxu0 0.0
  %360 = vmatprep.subr.mxu0 0.0
  %361 = vmatpush1.xpose.msra.mxu0 0.0
  %362 = vmatprep.subr.mxu0 0.0
  %363 = vmatpush1.xpose.msra.mxu0 0.0
  %364 = vmatprep.subr.mxu0 0.0
  %365 = vmatpush1.xpose.msra.mxu0 0.0
  %366 = vmatprep.subr.mxu0 0.0
  %367 = vmatpush1.xpose.msra.mxu0 0.0
  %368 = vmatprep.subr.mxu0 0.0
  %369 = vmatpush1.xpose.msra.mxu0 0.0
  %370 = vmatprep.subr.mxu0 0.0
  %371 = vmatpush1.xpose.msra.mxu0 %v129
  %372 = vmatprep.subr.mxu0 0.0
  %373 = vmatpush2.xpose.msra.mxu0 0.0
  %374 = vmatprep.subr.mxu0 0.0
  %375 = vmatpush2.xpose.msra.mxu0 0.0
  %376 = vmatprep.subr.mxu0 0.0
  %377 = vmatpush2.xpose.msra.mxu0 0.0
  %378 = vmatprep.subr.mxu0 0.0
  %379 = vmatpush2.xpose.msra.mxu0 0.0
  %380 = vmatprep.subr.mxu0 0.0
  %381 = vmatpush2.xpose.msra.mxu0 0.0
  %382 = vmatprep.subr.mxu0 0.0
  %383 = vmatpush2.xpose.msra.mxu0 0.0
  %384 = vmatprep.subr.mxu0 0.0
  %385 = vmatpush2.xpose.msra.mxu0 0.0
  %386 = vmatprep.subr.mxu0 0.0
  %387 = vmatpush2.xpose.msra.mxu0 0.0
  %388 = vmatprep.subr.mxu0 0.0
  %389 = vmatpush2.xpose.msra.mxu0 0.0
  %390 = vmatprep.subr.mxu0 0.0
  %391 = vmatpush2.xpose.msra.mxu0 0.0
  %392 = vmatprep.subr.mxu0 0.0
  %393 = vmatpush2.xpose.msra.mxu0 0.0
  %394 = vmatprep.subr.mxu0 0.0
  %395 = vmatpush2.xpose.msra.mxu0 0.0
  %396 = vmatprep.subr.mxu0 0.0
  %397 = vmatpush2.xpose.msra.mxu0 0.0
  %398 = vmatprep.subr.mxu0 0.0
  %399 = vmatpush2.xpose.msra.mxu0 0.0
  %400 = vmatprep.subr.mxu0 0.0
  %401 = vmatpush2.xpose.msra.mxu0 0.0
  %402 = vmatprep.subr.mxu0 0.0
  %403 = vmatpush2.xpose.msra.mxu0 0.0
  %404 = vmatprep.mubr.f32.mxu0 0.0
  %405 = vmatmul.mubr.f32.gmra.mxu0 %v129
  %v406 = vpop.f32.mrf.mxu0
  %v407 = vadd.f32 0.0, %v406
  %v408 = vpop.f32.mrf.mxu0
  %409 = vdwg.mxu0
  %v410 = vmul.f32 %v197, 0.25
  %v411 = vmul.f32 %v267, 0.25
  %v412 = vmul.f32 %v337, 0.25
  %v413 = vmul.f32 %v407, 0.25
  %vm414 = vcmask 27648
  %v415 = vsel %vm414, %v410, -inf
  %416 = vmax.xlane.f32.xlu0 %v415
  %v417 = vpop.xlane.xlu0 %416
  %v418 = vsel %vm414, %v411, -inf
  %419 = vmax.xlane.f32.xlu0 %v418
  %v420 = vpop.xlane.xlu0 %419
  %v421 = vsel %vm414, %v412, -inf
  %422 = vmax.xlane.f32.xlu0 %v421
  %v423 = vpop.xlane.xlu0 %422
  %v424 = vsel %vm414, %v413, -inf
  %425 = vmax.xlane.f32.xlu0 %v424
  %v426 = vpop.xlane.xlu0 %425
  %v427 = vsub.f32 %v410, %v417
  %v428 = vsub.f32 %v411, %v420
  %v429 = vsub.f32 %v412, %v423
  %v430 = vsub.f32 %v413, %v426
  %v431 = vmul.f32 %v427, 1.442695
  %v432 = vpow.pop %v431
  %v433 = vmul.f32 %v428, 1.442695
  %v434 = vpow.pop %v433
  %v435 = vmul.f32 %v429, 1.442695
  %v436 = vpow.pop %v435
  %v437 = vmul.f32 %v430, 1.442695
  %v438 = vpow.pop %v437
  %v439 = vsel %vm414, %v432, 0.0
  %440 = vadd.xlane.f32.xlu0 %v439
  %v441 = vpop.xlane.xlu0 %440
  %v442 = vsel %vm414, %v434, 0.0
  %443 = vadd.xlane.f32.xlu0 %v442
  %v444 = vpop.xlane.xlu0 %443
  %v445 = vsel %vm414, %v436, 0.0
  %446 = vadd.xlane.f32.xlu0 %v445
  %v447 = vpop.xlane.xlu0 %446
  %v448 = vsel %vm414, %v438, 0.0
  %449 = vadd.xlane.f32.xlu0 %v448
  %v450 = vpop.xlane.xlu0 %449
  %v451 = vrcp.pop %v441
  %v452 = vmul.f32 1.0, %v451
  %v453 = vrcp.pop %v444
  %v454 = vmul.f32 1.0, %v453
  %v455 = vrcp.pop %v447
  %v456 = vmul.f32 1.0, %v455
  %v457 = vrcp.pop %v450
  %v458 = vmul.f32 1.0, %v457
  %v459 = vmul.f32 %v432, %v452
  %v460 = vmul.f32 %v434, %v454
  %v461 = vmul.f32 %v436, %v456
  %v462 = vmul.f32 %v438, %v458
  %vm463 = vcmask 31744
  %v465 = vsel %vm463, %v459, 0
  %vm467 = vcmask 1043456
  %v469 = vsel %vm467, %v126, 0
  %471 = vmatprep.subr.mxu0 0.0
  %472 = vmatpush1.msra.mxu0 0.0
  %473 = vmatprep.subr.mxu0 0.0
  %474 = vmatpush1.msra.mxu0 0.0
  %475 = vmatprep.subr.mxu0 0.0
  %476 = vmatpush1.msra.mxu0 0.0
  %477 = vmatprep.subr.mxu0 0.0
  %478 = vmatpush1.msra.mxu0 0.0
  %479 = vmatprep.subr.mxu0 0.0
  %480 = vmatpush1.msra.mxu0 0.0
  %481 = vmatprep.subr.mxu0 0.0
  %482 = vmatpush1.msra.mxu0 0.0
  %483 = vmatprep.subr.mxu0 0.0
  %484 = vmatpush1.msra.mxu0 0.0
  %485 = vmatprep.subr.mxu0 0.0
  %486 = vmatpush1.msra.mxu0 0.0
  %487 = vmatprep.subr.mxu0 0.0
  %488 = vmatpush1.msra.mxu0 0.0
  %489 = vmatprep.subr.mxu0 0.0
  %490 = vmatpush1.msra.mxu0 0.0
  %491 = vmatprep.subr.mxu0 0.0
  %492 = vmatpush1.msra.mxu0 0.0
  %493 = vmatprep.subr.mxu0 0.0
  %494 = vmatpush1.msra.mxu0 0.0
  %495 = vmatprep.subr.mxu0 0.0
  %496 = vmatpush1.msra.mxu0 0.0
  %497 = vmatprep.subr.mxu0 0.0
  %498 = vmatpush1.msra.mxu0 0.0
  %499 = vmatprep.subr.mxu0 0.0
  %500 = vmatpush1.msra.mxu0 0.0
  %501 = vmatprep.subr.mxu0 0.0
  %502 = vmatpush1.msra.mxu0 %v469
  %503 = vmatprep.subr.mxu0 0.0
  %504 = vmatpush2.msra.mxu0 0.0
  %505 = vmatprep.subr.mxu0 0.0
  %506 = vmatpush2.msra.mxu0 0.0
  %507 = vmatprep.subr.mxu0 0.0
  %508 = vmatpush2.msra.mxu0 0.0
  %509 = vmatprep.subr.mxu0 0.0
  %510 = vmatpush2.msra.mxu0 0.0
  %511 = vmatprep.subr.mxu0 0.0
  %512 = vmatpush2.msra.mxu0 0.0
  %513 = vmatprep.subr.mxu0 0.0
  %514 = vmatpush2.msra.mxu0 0.0
  %515 = vmatprep.subr.mxu0 0.0
  %516 = vmatpush2.msra.mxu0 0.0
  %517 = vmatprep.subr.mxu0 0.0
  %518 = vmatpush2.msra.mxu0 0.0
  %519 = vmatprep.subr.mxu0 0.0
  %520 = vmatpush2.msra.mxu0 0.0
  %521 = vmatprep.subr.mxu0 0.0
  %522 = vmatpush2.msra.mxu0 0.0
  %523 = vmatprep.subr.mxu0 0.0
  %524 = vmatpush2.msra.mxu0 0.0
  %525 = vmatprep.subr.mxu0 0.0
  %526 = vmatpush2.msra.mxu0 0.0
  %527 = vmatprep.subr.mxu0 0.0
  %528 = vmatpush2.msra.mxu0 0.0
  %529 = vmatprep.subr.mxu0 0.0
  %530 = vmatpush2.msra.mxu0 0.0
  %531 = vmatprep.subr.mxu0 0.0
  %532 = vmatpush2.msra.mxu0 0.0
  %533 = vmatprep.subr.mxu0 0.0
  %534 = vmatpush2.msra.mxu0 0.0
  %535 = vmatprep.mubr.f32.mxu0 0.0
  %536 = vmatmul.mubr.f32.gmra.mxu0 %v465
  %v537 = vpop.f32.mrf.mxu0
  %v538 = vadd.f32 %v70, %v537
  %v539 = vpop.f32.mrf.mxu0
  %540 = vdwg.mxu0
  %v542 = vsel %vm463, %v460, 0
  %v545 = vsel %vm467, %v127, 0
  %547 = vmatprep.subr.mxu0 0.0
  %548 = vmatpush1.msra.mxu0 0.0
  %549 = vmatprep.subr.mxu0 0.0
  %550 = vmatpush1.msra.mxu0 0.0
  %551 = vmatprep.subr.mxu0 0.0
  %552 = vmatpush1.msra.mxu0 0.0
  %553 = vmatprep.subr.mxu0 0.0
  %554 = vmatpush1.msra.mxu0 0.0
  %555 = vmatprep.subr.mxu0 0.0
  %556 = vmatpush1.msra.mxu0 0.0
  %557 = vmatprep.subr.mxu0 0.0
  %558 = vmatpush1.msra.mxu0 0.0
  %559 = vmatprep.subr.mxu0 0.0
  %560 = vmatpush1.msra.mxu0 0.0
  %561 = vmatprep.subr.mxu0 0.0
  %562 = vmatpush1.msra.mxu0 0.0
  %563 = vmatprep.subr.mxu0 0.0
  %564 = vmatpush1.msra.mxu0 0.0
  %565 = vmatprep.subr.mxu0 0.0
  %566 = vmatpush1.msra.mxu0 0.0
  %567 = vmatprep.subr.mxu0 0.0
  %568 = vmatpush1.msra.mxu0 0.0
  %569 = vmatprep.subr.mxu0 0.0
  %570 = vmatpush1.msra.mxu0 0.0
  %571 = vmatprep.subr.mxu0 0.0
  %572 = vmatpush1.msra.mxu0 0.0
  %573 = vmatprep.subr.mxu0 0.0
  %574 = vmatpush1.msra.mxu0 0.0
  %575 = vmatprep.subr.mxu0 0.0
  %576 = vmatpush1.msra.mxu0 0.0
  %577 = vmatprep.subr.mxu0 0.0
  %578 = vmatpush1.msra.mxu0 %v545
  %579 = vmatprep.subr.mxu0 0.0
  %580 = vmatpush2.msra.mxu0 0.0
  %581 = vmatprep.subr.mxu0 0.0
  %582 = vmatpush2.msra.mxu0 0.0
  %583 = vmatprep.subr.mxu0 0.0
  %584 = vmatpush2.msra.mxu0 0.0
  %585 = vmatprep.subr.mxu0 0.0
  %586 = vmatpush2.msra.mxu0 0.0
  %587 = vmatprep.subr.mxu0 0.0
  %588 = vmatpush2.msra.mxu0 0.0
  %589 = vmatprep.subr.mxu0 0.0
  %590 = vmatpush2.msra.mxu0 0.0
  %591 = vmatprep.subr.mxu0 0.0
  %592 = vmatpush2.msra.mxu0 0.0
  %593 = vmatprep.subr.mxu0 0.0
  %594 = vmatpush2.msra.mxu0 0.0
  %595 = vmatprep.subr.mxu0 0.0
  %596 = vmatpush2.msra.mxu0 0.0
  %597 = vmatprep.subr.mxu0 0.0
  %598 = vmatpush2.msra.mxu0 0.0
  %599 = vmatprep.subr.mxu0 0.0
  %600 = vmatpush2.msra.mxu0 0.0
  %601 = vmatprep.subr.mxu0 0.0
  %602 = vmatpush2.msra.mxu0 0.0
  %603 = vmatprep.subr.mxu0 0.0
  %604 = vmatpush2.msra.mxu0 0.0
  %605 = vmatprep.subr.mxu0 0.0
  %606 = vmatpush2.msra.mxu0 0.0
  %607 = vmatprep.subr.mxu0 0.0
  %608 = vmatpush2.msra.mxu0 0.0
  %609 = vmatprep.subr.mxu0 0.0
  %610 = vmatpush2.msra.mxu0 0.0
  %611 = vmatprep.mubr.f32.mxu0 0.0
  %612 = vmatmul.mubr.f32.gmra.mxu0 %v542
  %v613 = vpop.f32.mrf.mxu0
  %v614 = vadd.f32 %v70, %v613
  %v615 = vpop.f32.mrf.mxu0
  %616 = vdwg.mxu0
  %v618 = vsel %vm463, %v461, 0
  %v621 = vsel %vm467, %v128, 0
  %623 = vmatprep.subr.mxu0 0.0
  %624 = vmatpush1.msra.mxu0 0.0
  %625 = vmatprep.subr.mxu0 0.0
  %626 = vmatpush1.msra.mxu0 0.0
  %627 = vmatprep.subr.mxu0 0.0
  %628 = vmatpush1.msra.mxu0 0.0
  %629 = vmatprep.subr.mxu0 0.0
  %630 = vmatpush1.msra.mxu0 0.0
  %631 = vmatprep.subr.mxu0 0.0
  %632 = vmatpush1.msra.mxu0 0.0
  %633 = vmatprep.subr.mxu0 0.0
  %634 = vmatpush1.msra.mxu0 0.0
  %635 = vmatprep.subr.mxu0 0.0
  %636 = vmatpush1.msra.mxu0 0.0
  %637 = vmatprep.subr.mxu0 0.0
  %638 = vmatpush1.msra.mxu0 0.0
  %639 = vmatprep.subr.mxu0 0.0
  %640 = vmatpush1.msra.mxu0 0.0
  %641 = vmatprep.subr.mxu0 0.0
  %642 = vmatpush1.msra.mxu0 0.0
  %643 = vmatprep.subr.mxu0 0.0
  %644 = vmatpush1.msra.mxu0 0.0
  %645 = vmatprep.subr.mxu0 0.0
  %646 = vmatpush1.msra.mxu0 0.0
  %647 = vmatprep.subr.mxu0 0.0
  %648 = vmatpush1.msra.mxu0 0.0
  %649 = vmatprep.subr.mxu0 0.0
  %650 = vmatpush1.msra.mxu0 0.0
  %651 = vmatprep.subr.mxu0 0.0
  %652 = vmatpush1.msra.mxu0 0.0
  %653 = vmatprep.subr.mxu0 0.0
  %654 = vmatpush1.msra.mxu0 %v621
  %655 = vmatprep.subr.mxu0 0.0
  %656 = vmatpush2.msra.mxu0 0.0
  %657 = vmatprep.subr.mxu0 0.0
  %658 = vmatpush2.msra.mxu0 0.0
  %659 = vmatprep.subr.mxu0 0.0
  %660 = vmatpush2.msra.mxu0 0.0
  %661 = vmatprep.subr.mxu0 0.0
  %662 = vmatpush2.msra.mxu0 0.0
  %663 = vmatprep.subr.mxu0 0.0
  %664 = vmatpush2.msra.mxu0 0.0
  %665 = vmatprep.subr.mxu0 0.0
  %666 = vmatpush2.msra.mxu0 0.0
  %667 = vmatprep.subr.mxu0 0.0
  %668 = vmatpush2.msra.mxu0 0.0
  %669 = vmatprep.subr.mxu0 0.0
  %670 = vmatpush2.msra.mxu0 0.0
  %671 = vmatprep.subr.mxu0 0.0
  %672 = vmatpush2.msra.mxu0 0.0
  %673 = vmatprep.subr.mxu0 0.0
  %674 = vmatpush2.msra.mxu0 0.0
  %675 = vmatprep.subr.mxu0 0.0
  %676 = vmatpush2.msra.mxu0 0.0
  %677 = vmatprep.subr.mxu0 0.0
  %678 = vmatpush2.msra.mxu0 0.0
  %679 = vmatprep.subr.mxu0 0.0
  %680 = vmatpush2.msra.mxu0 0.0
  %681 = vmatprep.subr.mxu0 0.0
  %682 = vmatpush2.msra.mxu0 0.0
  %683 = vmatprep.subr.mxu0 0.0
  %684 = vmatpush2.msra.mxu0 0.0
  %685 = vmatprep.subr.mxu0 0.0
  %686 = vmatpush2.msra.mxu0 0.0
  %687 = vmatprep.mubr.f32.mxu0 0.0
  %688 = vmatmul.mubr.f32.gmra.mxu0 %v618
  %v689 = vpop.f32.mrf.mxu0
  %v690 = vadd.f32 %v70, %v689
  %v691 = vpop.f32.mrf.mxu0
  %692 = vdwg.mxu0
  %v694 = vsel %vm463, %v462, 0
  %v697 = vsel %vm467, %v129, 0
  %699 = vmatprep.subr.mxu0 0.0
  %700 = vmatpush1.msra.mxu0 0.0
  %701 = vmatprep.subr.mxu0 0.0
  %702 = vmatpush1.msra.mxu0 0.0
  %703 = vmatprep.subr.mxu0 0.0
  %704 = vmatpush1.msra.mxu0 0.0
  %705 = vmatprep.subr.mxu0 0.0
  %706 = vmatpush1.msra.mxu0 0.0
  %707 = vmatprep.subr.mxu0 0.0
  %708 = vmatpush1.msra.mxu0 0.0
  %709 = vmatprep.subr.mxu0 0.0
  %710 = vmatpush1.msra.mxu0 0.0
  %711 = vmatprep.subr.mxu0 0.0
  %712 = vmatpush1.msra.mxu0 0.0
  %713 = vmatprep.subr.mxu0 0.0
  %714 = vmatpush1.msra.mxu0 0.0
  %715 = vmatprep.subr.mxu0 0.0
  %716 = vmatpush1.msra.mxu0 0.0
  %717 = vmatprep.subr.mxu0 0.0
  %718 = vmatpush1.msra.mxu0 0.0
  %719 = vmatprep.subr.mxu0 0.0
  %720 = vmatpush1.msra.mxu0 0.0
  %721 = vmatprep.subr.mxu0 0.0
  %722 = vmatpush1.msra.mxu0 0.0
  %723 = vmatprep.subr.mxu0 0.0
  %724 = vmatpush1.msra.mxu0 0.0
  %725 = vmatprep.subr.mxu0 0.0
  %726 = vmatpush1.msra.mxu0 0.0
  %727 = vmatprep.subr.mxu0 0.0
  %728 = vmatpush1.msra.mxu0 0.0
  %729 = vmatprep.subr.mxu0 0.0
  %730 = vmatpush1.msra.mxu0 %v697
  %731 = vmatprep.subr.mxu0 0.0
  %732 = vmatpush2.msra.mxu0 0.0
  %733 = vmatprep.subr.mxu0 0.0
  %734 = vmatpush2.msra.mxu0 0.0
  %735 = vmatprep.subr.mxu0 0.0
  %736 = vmatpush2.msra.mxu0 0.0
  %737 = vmatprep.subr.mxu0 0.0
  %738 = vmatpush2.msra.mxu0 0.0
  %739 = vmatprep.subr.mxu0 0.0
  %740 = vmatpush2.msra.mxu0 0.0
  %741 = vmatprep.subr.mxu0 0.0
  %742 = vmatpush2.msra.mxu0 0.0
  %743 = vmatprep.subr.mxu0 0.0
  %744 = vmatpush2.msra.mxu0 0.0
  %745 = vmatprep.subr.mxu0 0.0
  %746 = vmatpush2.msra.mxu0 0.0
  %747 = vmatprep.subr.mxu0 0.0
  %748 = vmatpush2.msra.mxu0 0.0
  %749 = vmatprep.subr.mxu0 0.0
  %750 = vmatpush2.msra.mxu0 0.0
  %751 = vmatprep.subr.mxu0 0.0
  %752 = vmatpush2.msra.mxu0 0.0
  %753 = vmatprep.subr.mxu0 0.0
  %754 = vmatpush2.msra.mxu0 0.0
  %755 = vmatprep.subr.mxu0 0.0
  %756 = vmatpush2.msra.mxu0 0.0
  %757 = vmatprep.subr.mxu0 0.0
  %758 = vmatpush2.msra.mxu0 0.0
  %759 = vmatprep.subr.mxu0 0.0
  %760 = vmatpush2.msra.mxu0 0.0
  %761 = vmatprep.subr.mxu0 0.0
  %762 = vmatpush2.msra.mxu0 0.0
  %763 = vmatprep.mubr.f32.mxu0 0.0
  %764 = vmatmul.mubr.f32.gmra.mxu0 %v694
  %v765 = vpop.f32.mrf.mxu0
  %v766 = vadd.f32 %v70, %v765
  %v767 = vpop.f32.mrf.mxu0
  %768 = vdwg.mxu0
  %v769 = vld [vmem:[%s4] sm:$0x1]
  %v770 = vld [vmem:[%s5] sm:$0x1]
  %v771 = vsel %vm467, %v538, 0.0
  %772 = vadd.xlane.f32.xlu0 %v771
  %v773 = vpop.xlane.xlu0 %772
  %v774 = vsel %vm467, %v614, 0.0
  %775 = vadd.xlane.f32.xlu0 %v774
  %v776 = vpop.xlane.xlu0 %775
  %v777 = vsel %vm467, %v690, 0.0
  %778 = vadd.xlane.f32.xlu0 %v777
  %v779 = vpop.xlane.xlu0 %778
  %v780 = vsel %vm467, %v766, 0.0
  %781 = vadd.xlane.f32.xlu0 %v780
  %v782 = vpop.xlane.xlu0 %781
  %v783 = vrcp.pop 128.0
  %v784 = vmul.f32 %v773, %v783
  %v785 = vmul.f32 %v776, %v783
  %v786 = vmul.f32 %v779, %v783
  %v787 = vmul.f32 %v782, %v783
  %v788 = vsub.f32 %v538, %v784
  %v789 = vsub.f32 %v614, %v785
  %v790 = vsub.f32 %v690, %v786
  %v791 = vsub.f32 %v766, %v787
  %v792 = vmul.f32 %v788, %v788
  %v793 = vmul.f32 %v789, %v789
  %v794 = vmul.f32 %v790, %v790
  %v795 = vmul.f32 %v791, %v791
  %v796 = vsel %vm467, %v792, 0.0
  %797 = vadd.xlane.f32.xlu0 %v796
  %v798 = vpop.xlane.xlu0 %797
  %v799 = vsel %vm467, %v793, 0.0
  %800 = vadd.xlane.f32.xlu0 %v799
  %v801 = vpop.xlane.xlu0 %800
  %v802 = vsel %vm467, %v794, 0.0
  %803 = vadd.xlane.f32.xlu0 %v802
  %v804 = vpop.xlane.xlu0 %803
  %v805 = vsel %vm467, %v795, 0.0
  %806 = vadd.xlane.f32.xlu0 %v805
  %v807 = vpop.xlane.xlu0 %806
  %v808 = vmul.f32 %v798, %v783
  %v809 = vmul.f32 %v801, %v783
  %v810 = vmul.f32 %v804, %v783
  %v811 = vmul.f32 %v807, %v783
  %v812 = vadd.f32 %v808, 1e-05
  %v813 = vadd.f32 %v809, 1e-05
  %v814 = vadd.f32 %v810, 1e-05
  %v815 = vadd.f32 %v811, 1e-05
  %v816 = vrsqrt.pop %v812
  %v817 = vrsqrt.pop %v813
  %v818 = vrsqrt.pop %v814
  %v819 = vrsqrt.pop %v815
  %v820 = vmul.f32 %v788, %v816
  %v821 = vmul.f32 %v789, %v817
  %v822 = vmul.f32 %v790, %v818
  %v823 = vmul.f32 %v791, %v819
  %v825 = vlaneseq
  %v826 = vshrl.u32 %v825, 7
  %v827 = vsub.s32 0, %v826
  %v828 = vrot.slane %v769, %v827
  %v830 = vmul.f32 %v820, %v828
  %v831 = vmul.f32 %v821, %v828
  %v832 = vmul.f32 %v822, %v828
  %v833 = vmul.f32 %v823, %v828
  %v835 = vlaneseq
  %v836 = vshrl.u32 %v835, 7
  %v837 = vsub.s32 0, %v836
  %v838 = vrot.slane %v770, %v837
  %v840 = vadd.f32 %v830, %v838
  %v841 = vadd.f32 %v831, %v838
  %v842 = vadd.f32 %v832, %v838
  %v843 = vadd.f32 %v833, %v838
  %v848 = vcombine.low %v840, %v841
  %v849 = vcombine.low %v842, %v843
  %v852 = vpack.c.bf16 %v849, %v848
  %v853 = vld [vmem:[%s8] sm:$0xff]
  %v854 = vld [vmem:[%s8 + $0x8] sm:$0xff]
  %v855 = vld [vmem:[%s8 + $0x10] sm:$0xff]
  %v856 = vld [vmem:[%s8 + $0x18] sm:$0xff]
  %v857 = vld [vmem:[%s8 + $0x20] sm:$0xff]
  %v858 = vld [vmem:[%s8 + $0x28] sm:$0xff]
  %v859 = vld [vmem:[%s8 + $0x30] sm:$0xff]
  %v860 = vld [vmem:[%s8 + $0x38] sm:$0xff]
  %v861 = vld [vmem:[%s8 + $0x40] sm:$0xff]
  %v862 = vld [vmem:[%s8 + $0x48] sm:$0xff]
  %v863 = vld [vmem:[%s8 + $0x50] sm:$0xff]
  %v864 = vld [vmem:[%s8 + $0x58] sm:$0xff]
  %v865 = vld [vmem:[%s8 + $0x60] sm:$0xff]
  %v866 = vld [vmem:[%s8 + $0x68] sm:$0xff]
  %v867 = vld [vmem:[%s8 + $0x70] sm:$0xff]
  %v868 = vld [vmem:[%s8 + $0x78] sm:$0xff]
  %v869 = vld [vmem:[%s8 + $0x80] sm:$0xff]
  %v870 = vld [vmem:[%s8 + $0x88] sm:$0xff]
  %v871 = vld [vmem:[%s8 + $0x90] sm:$0xff]
  %v872 = vld [vmem:[%s8 + $0x98] sm:$0xff]
  %v873 = vld [vmem:[%s8 + $0xa0] sm:$0xff]
  %v874 = vld [vmem:[%s8 + $0xa8] sm:$0xff]
  %v875 = vld [vmem:[%s8 + $0xb0] sm:$0xff]
  %v876 = vld [vmem:[%s8 + $0xb8] sm:$0xff]
  %v877 = vld [vmem:[%s8 + $0xc0] sm:$0xff]
  %v878 = vld [vmem:[%s8 + $0xc8] sm:$0xff]
  %v879 = vld [vmem:[%s8 + $0xd0] sm:$0xff]
  %v880 = vld [vmem:[%s8 + $0xd8] sm:$0xff]
  %v881 = vld [vmem:[%s8 + $0xe0] sm:$0xff]
  %v882 = vld [vmem:[%s8 + $0xe8] sm:$0xff]
  %v883 = vld [vmem:[%s8 + $0xf0] sm:$0xff]
  %v884 = vld [vmem:[%s8 + $0xf8] sm:$0xff]
  %v885 = vld [vmem:[%s9] sm:$0xf]
  %v887 = vlaneseq
  %v888 = vshrl.u32 %v887, 7
  %v889 = vsub.s32 0, %v888
  %v890 = vrot.slane %v885, %v889
  %v891 = vlaneseq
  %v892 = vshrl.u32 %v891, 7
  %v893 = vsub.s32 1, %v892
  %v894 = vrot.slane %v885, %v893
  %v895 = vlaneseq
  %v896 = vshrl.u32 %v895, 7
  %v897 = vsub.s32 2, %v896
  %v898 = vrot.slane %v885, %v897
  %v899 = vlaneseq
  %v900 = vshrl.u32 %v899, 7
  %v901 = vsub.s32 3, %v900
  %v902 = vrot.slane %v885, %v901
  %v939 = vunpack.c.l.b16 %v853
  %v940 = vunpack.c.h.b16 %v853
  %v941 = vunpack.c.l.b16 %v854
  %v942 = vunpack.c.h.b16 %v854
  %v943 = vunpack.c.l.b16 %v855
  %v944 = vunpack.c.h.b16 %v855
  %v945 = vunpack.c.l.b16 %v856
  %v946 = vunpack.c.h.b16 %v856
  %v947 = vunpack.c.l.b16 %v857
  %v948 = vunpack.c.h.b16 %v857
  %v949 = vunpack.c.l.b16 %v858
  %v950 = vunpack.c.h.b16 %v858
  %v951 = vunpack.c.l.b16 %v859
  %v952 = vunpack.c.h.b16 %v859
  %v953 = vunpack.c.l.b16 %v860
  %v954 = vunpack.c.h.b16 %v860
  %v955 = vunpack.c.l.b16 %v861
  %v956 = vunpack.c.h.b16 %v861
  %v957 = vunpack.c.l.b16 %v862
  %v958 = vunpack.c.h.b16 %v862
  %v959 = vunpack.c.l.b16 %v863
  %v960 = vunpack.c.h.b16 %v863
  %v961 = vunpack.c.l.b16 %v864
  %v962 = vunpack.c.h.b16 %v864
  %v963 = vunpack.c.l.b16 %v865
  %v964 = vunpack.c.h.b16 %v865
  %v965 = vunpack.c.l.b16 %v866
  %v966 = vunpack.c.h.b16 %v866
  %v967 = vunpack.c.l.b16 %v867
  %v968 = vunpack.c.h.b16 %v867
  %v969 = vunpack.c.l.b16 %v868
  %v970 = vunpack.c.h.b16 %v868
  %v971 = vunpack.c.l.b16 %v869
  %v972 = vunpack.c.h.b16 %v869
  %v973 = vunpack.c.l.b16 %v870
  %v974 = vunpack.c.h.b16 %v870
  %v975 = vunpack.c.l.b16 %v871
  %v976 = vunpack.c.h.b16 %v871
  %v977 = vunpack.c.l.b16 %v872
  %v978 = vunpack.c.h.b16 %v872
  %v979 = vunpack.c.l.b16 %v873
  %v980 = vunpack.c.h.b16 %v873
  %v981 = vunpack.c.l.b16 %v874
  %v982 = vunpack.c.h.b16 %v874
  %v983 = vunpack.c.l.b16 %v875
  %v984 = vunpack.c.h.b16 %v875
  %v985 = vunpack.c.l.b16 %v876
  %v986 = vunpack.c.h.b16 %v876
  %v987 = vunpack.c.l.b16 %v877
  %v988 = vunpack.c.h.b16 %v877
  %v989 = vunpack.c.l.b16 %v878
  %v990 = vunpack.c.h.b16 %v878
  %v991 = vunpack.c.l.b16 %v879
  %v992 = vunpack.c.h.b16 %v879
  %v993 = vunpack.c.l.b16 %v880
  %v994 = vunpack.c.h.b16 %v880
  %v995 = vunpack.c.l.b16 %v881
  %v996 = vunpack.c.h.b16 %v881
  %v997 = vunpack.c.l.b16 %v882
  %v998 = vunpack.c.h.b16 %v882
  %v999 = vunpack.c.l.b16 %v883
  %v1000 = vunpack.c.h.b16 %v883
  %v1001 = vunpack.c.l.b16 %v884
  %v1002 = vunpack.c.h.b16 %v884
  %v1003 = vpack.c.b16 %v943, %v939
  %v1004 = vpack.c.b16 %v944, %v940
  %v1005 = vpack.c.b16 %v945, %v941
  %v1006 = vpack.c.b16 %v946, %v942
  %v1007 = vpack.c.b16 %v951, %v947
  %v1008 = vpack.c.b16 %v952, %v948
  %v1009 = vpack.c.b16 %v953, %v949
  %v1010 = vpack.c.b16 %v954, %v950
  %v1011 = vpack.c.b16 %v959, %v955
  %v1012 = vpack.c.b16 %v960, %v956
  %v1013 = vpack.c.b16 %v961, %v957
  %v1014 = vpack.c.b16 %v962, %v958
  %v1015 = vpack.c.b16 %v967, %v963
  %v1016 = vpack.c.b16 %v968, %v964
  %v1017 = vpack.c.b16 %v969, %v965
  %v1018 = vpack.c.b16 %v970, %v966
  %v1019 = vpack.c.b16 %v975, %v971
  %v1020 = vpack.c.b16 %v976, %v972
  %v1021 = vpack.c.b16 %v977, %v973
  %v1022 = vpack.c.b16 %v978, %v974
  %v1023 = vpack.c.b16 %v983, %v979
  %v1024 = vpack.c.b16 %v984, %v980
  %v1025 = vpack.c.b16 %v985, %v981
  %v1026 = vpack.c.b16 %v986, %v982
  %v1027 = vpack.c.b16 %v991, %v987
  %v1028 = vpack.c.b16 %v992, %v988
  %v1029 = vpack.c.b16 %v993, %v989
  %v1030 = vpack.c.b16 %v994, %v990
  %v1031 = vpack.c.b16 %v999, %v995
  %v1032 = vpack.c.b16 %v1000, %v996
  %v1033 = vpack.c.b16 %v1001, %v997
  %v1034 = vpack.c.b16 %v1002, %v998
  %1067 = vmatprep.subr.bf16.mxu0 %v1032
  %1068 = vmatpush1.bf16.msra.mxu0 %v1031
  %1069 = vmatprep.subr.bf16.mxu0 %v1028
  %1070 = vmatpush1.bf16.msra.mxu0 %v1027
  %1071 = vmatprep.subr.bf16.mxu0 %v1024
  %1072 = vmatpush1.bf16.msra.mxu0 %v1023
  %1073 = vmatprep.subr.bf16.mxu0 %v1020
  %1074 = vmatpush1.bf16.msra.mxu0 %v1019
  %1075 = vmatprep.subr.bf16.mxu0 %v1016
  %1076 = vmatpush1.bf16.msra.mxu0 %v1015
  %1077 = vmatprep.subr.bf16.mxu0 %v1012
  %1078 = vmatpush1.bf16.msra.mxu0 %v1011
  %1079 = vmatprep.subr.bf16.mxu0 %v1008
  %1080 = vmatpush1.bf16.msra.mxu0 %v1007
  %1081 = vmatprep.subr.bf16.mxu0 %v1004
  %1082 = vmatpush1.bf16.msra.mxu0 %v1003
  %1083 = vmatprep.subr.bf16.mxu0 0
  %1084 = vmatpush2.bf16.msra.mxu0 0
  %1085 = vmatprep.subr.bf16.mxu0 0
  %1086 = vmatpush2.bf16.msra.mxu0 0
  %1087 = vmatprep.subr.bf16.mxu0 0
  %1088 = vmatpush2.bf16.msra.mxu0 0
  %1089 = vmatprep.subr.bf16.mxu0 0
  %1090 = vmatpush2.bf16.msra.mxu0 0
  %1091 = vmatprep.subr.bf16.mxu0 0
  %1092 = vmatpush2.bf16.msra.mxu0 0
  %1093 = vmatprep.subr.bf16.mxu0 0
  %1094 = vmatpush2.bf16.msra.mxu0 0
  %1095 = vmatprep.subr.bf16.mxu0 0
  %1096 = vmatpush2.bf16.msra.mxu0 0
  %1097 = vmatprep.subr.bf16.mxu0 0
  %1098 = vmatpush2.bf16.msra.mxu0 0
  %1099 = vmatprep.mubr.bf16.mxu0 0
  %1100 = vmatmul.mubr.bf16.gmra.mxu0 %v852
  %v1101 = vpop.f32.mrf.mxu0
  %v1102 = vadd.f32 %v890, %v1101
  %v1103 = vpop.f32.mrf.mxu0
  %v1104 = vadd.f32 %v894, %v1103
  %v1105 = vpop.f32.mrf.mxu0
  %v1106 = vadd.f32 %v890, %v1105
  %v1107 = vpop.f32.mrf.mxu0
  %v1108 = vadd.f32 %v894, %v1107
  %1109 = vdwg.mxu0
  %1110 = vmatprep.subr.bf16.mxu0 %v1034
  %1111 = vmatpush1.bf16.msra.mxu0 %v1033
  %1112 = vmatprep.subr.bf16.mxu0 %v1030
  %1113 = vmatpush1.bf16.msra.mxu0 %v1029
  %1114 = vmatprep.subr.bf16.mxu0 %v1026
  %1115 = vmatpush1.bf16.msra.mxu0 %v1025
  %1116 = vmatprep.subr.bf16.mxu0 %v1022
  %1117 = vmatpush1.bf16.msra.mxu0 %v1021
  %1118 = vmatprep.subr.bf16.mxu0 %v1018
  %1119 = vmatpush1.bf16.msra.mxu0 %v1017
  %1120 = vmatprep.subr.bf16.mxu0 %v1014
  %1121 = vmatpush1.bf16.msra.mxu0 %v1013
  %1122 = vmatprep.subr.bf16.mxu0 %v1010
  %1123 = vmatpush1.bf16.msra.mxu0 %v1009
  %1124 = vmatprep.subr.bf16.mxu0 %v1006
  %1125 = vmatpush1.bf16.msra.mxu0 %v1005
  %1126 = vmatprep.subr.bf16.mxu0 0
  %1127 = vmatpush2.bf16.msra.mxu0 0
  %1128 = vmatprep.subr.bf16.mxu0 0
  %1129 = vmatpush2.bf16.msra.mxu0 0
  %1130 = vmatprep.subr.bf16.mxu0 0
  %1131 = vmatpush2.bf16.msra.mxu0 0
  %1132 = vmatprep.subr.bf16.mxu0 0
  %1133 = vmatpush2.bf16.msra.mxu0 0
  %1134 = vmatprep.subr.bf16.mxu0 0
  %1135 = vmatpush2.bf16.msra.mxu0 0
  %1136 = vmatprep.subr.bf16.mxu0 0
  %1137 = vmatpush2.bf16.msra.mxu0 0
  %1138 = vmatprep.subr.bf16.mxu0 0
  %1139 = vmatpush2.bf16.msra.mxu0 0
  %1140 = vmatprep.subr.bf16.mxu0 0
  %1141 = vmatpush2.bf16.msra.mxu0 0
  %1142 = vmatprep.mubr.bf16.mxu0 0
  %1143 = vmatmul.mubr.bf16.gmra.mxu0 %v852
  %v1144 = vpop.f32.mrf.mxu0
  %v1145 = vadd.f32 %v898, %v1144
  %v1146 = vpop.f32.mrf.mxu0
  %v1147 = vadd.f32 %v902, %v1146
  %v1148 = vpop.f32.mrf.mxu0
  %v1149 = vadd.f32 %v898, %v1148
  %v1150 = vpop.f32.mrf.mxu0
  %v1151 = vadd.f32 %v902, %v1150
  %1152 = vdwg.mxu0
  %v1153 = vmax.f32 %v1102, 0.0
  %v1154 = vmax.f32 %v1104, 0.0
  %v1155 = vmax.f32 %v1145, 0.0
  %v1156 = vmax.f32 %v1147, 0.0
  %v1157 = vmax.f32 %v1106, 0.0
  %v1158 = vmax.f32 %v1108, 0.0
  %v1159 = vmax.f32 %v1149, 0.0
  %v1160 = vmax.f32 %v1151, 0.0
  %v1161 = vpack.c.bf16 %v1157, %v1153
  %v1162 = vpack.c.bf16 %v1158, %v1154
  %v1163 = vpack.c.bf16 %v1159, %v1155
  %v1164 = vpack.c.bf16 %v1160, %v1156
  %v1165 = vld [vmem:[%s10] sm:$0xf]
  %v1166 = vld [vmem:[%s10 + $0x4] sm:$0xf]
  %v1167 = vld [vmem:[%s10 + $0x8] sm:$0xf]
  %v1168 = vld [vmem:[%s10 + $0xc] sm:$0xf]
  %v1169 = vld [vmem:[%s10 + $0x10] sm:$0xf]
  %v1170 = vld [vmem:[%s10 + $0x14] sm:$0xf]
  %v1171 = vld [vmem:[%s10 + $0x18] sm:$0xf]
  %v1172 = vld [vmem:[%s10 + $0x1c] sm:$0xf]
  %v1173 = vld [vmem:[%s10 + $0x20] sm:$0xf]
  %v1174 = vld [vmem:[%s10 + $0x24] sm:$0xf]
  %v1175 = vld [vmem:[%s10 + $0x28] sm:$0xf]
  %v1176 = vld [vmem:[%s10 + $0x2c] sm:$0xf]
  %v1177 = vld [vmem:[%s10 + $0x30] sm:$0xf]
  %v1178 = vld [vmem:[%s10 + $0x34] sm:$0xf]
  %v1179 = vld [vmem:[%s10 + $0x38] sm:$0xf]
  %v1180 = vld [vmem:[%s10 + $0x3c] sm:$0xf]
  %v1181 = vld [vmem:[%s10 + $0x40] sm:$0xf]
  %v1182 = vld [vmem:[%s10 + $0x44] sm:$0xf]
  %v1183 = vld [vmem:[%s10 + $0x48] sm:$0xf]
  %v1184 = vld [vmem:[%s10 + $0x4c] sm:$0xf]
  %v1185 = vld [vmem:[%s10 + $0x50] sm:$0xf]
  %v1186 = vld [vmem:[%s10 + $0x54] sm:$0xf]
  %v1187 = vld [vmem:[%s10 + $0x58] sm:$0xf]
  %v1188 = vld [vmem:[%s10 + $0x5c] sm:$0xf]
  %v1189 = vld [vmem:[%s10 + $0x60] sm:$0xf]
  %v1190 = vld [vmem:[%s10 + $0x64] sm:$0xf]
  %v1191 = vld [vmem:[%s10 + $0x68] sm:$0xf]
  %v1192 = vld [vmem:[%s10 + $0x6c] sm:$0xf]
  %v1193 = vld [vmem:[%s10 + $0x70] sm:$0xf]
  %v1194 = vld [vmem:[%s10 + $0x74] sm:$0xf]
  %v1195 = vld [vmem:[%s10 + $0x78] sm:$0xf]
  %v1196 = vld [vmem:[%s10 + $0x7c] sm:$0xf]
  %v1197 = vld [vmem:[%s10 + $0x80] sm:$0xf]
  %v1198 = vld [vmem:[%s10 + $0x84] sm:$0xf]
  %v1199 = vld [vmem:[%s10 + $0x88] sm:$0xf]
  %v1200 = vld [vmem:[%s10 + $0x8c] sm:$0xf]
  %v1201 = vld [vmem:[%s10 + $0x90] sm:$0xf]
  %v1202 = vld [vmem:[%s10 + $0x94] sm:$0xf]
  %v1203 = vld [vmem:[%s10 + $0x98] sm:$0xf]
  %v1204 = vld [vmem:[%s10 + $0x9c] sm:$0xf]
  %v1205 = vld [vmem:[%s10 + $0xa0] sm:$0xf]
  %v1206 = vld [vmem:[%s10 + $0xa4] sm:$0xf]
  %v1207 = vld [vmem:[%s10 + $0xa8] sm:$0xf]
  %v1208 = vld [vmem:[%s10 + $0xac] sm:$0xf]
  %v1209 = vld [vmem:[%s10 + $0xb0] sm:$0xf]
  %v1210 = vld [vmem:[%s10 + $0xb4] sm:$0xf]
  %v1211 = vld [vmem:[%s10 + $0xb8] sm:$0xf]
  %v1212 = vld [vmem:[%s10 + $0xbc] sm:$0xf]
  %v1213 = vld [vmem:[%s10 + $0xc0] sm:$0xf]
  %v1214 = vld [vmem:[%s10 + $0xc4] sm:$0xf]
  %v1215 = vld [vmem:[%s10 + $0xc8] sm:$0xf]
  %v1216 = vld [vmem:[%s10 + $0xcc] sm:$0xf]
  %v1217 = vld [vmem:[%s10 + $0xd0] sm:$0xf]
  %v1218 = vld [vmem:[%s10 + $0xd4] sm:$0xf]
  %v1219 = vld [vmem:[%s10 + $0xd8] sm:$0xf]
  %v1220 = vld [vmem:[%s10 + $0xdc] sm:$0xf]
  %v1221 = vld [vmem:[%s10 + $0xe0] sm:$0xf]
  %v1222 = vld [vmem:[%s10 + $0xe4] sm:$0xf]
  %v1223 = vld [vmem:[%s10 + $0xe8] sm:$0xf]
  %v1224 = vld [vmem:[%s10 + $0xec] sm:$0xf]
  %v1225 = vld [vmem:[%s10 + $0xf0] sm:$0xf]
  %v1226 = vld [vmem:[%s10 + $0xf4] sm:$0xf]
  %v1227 = vld [vmem:[%s10 + $0xf8] sm:$0xf]
  %v1228 = vld [vmem:[%s10 + $0xfc] sm:$0xf]
  %v1229 = vld [vmem:[%s11] sm:$0x1]
  %v1231 = vlaneseq
  %v1232 = vshrl.u32 %v1231, 7
  %v1233 = vsub.s32 0, %v1232
  %v1234 = vrot.slane %v1229, %v1233
  %v1300 = vunpack.c.l.b16 %v1165
  %v1301 = vunpack.c.l.b16 %v1166
  %v1302 = vunpack.c.l.b16 %v1167
  %v1303 = vunpack.c.l.b16 %v1168
  %v1304 = vunpack.c.l.b16 %v1169
  %v1305 = vunpack.c.l.b16 %v1170
  %v1306 = vunpack.c.l.b16 %v1171
  %v1307 = vunpack.c.l.b16 %v1172
  %v1308 = vunpack.c.l.b16 %v1173
  %v1309 = vunpack.c.l.b16 %v1174
  %v1310 = vunpack.c.l.b16 %v1175
  %v1311 = vunpack.c.l.b16 %v1176
  %v1312 = vunpack.c.l.b16 %v1177
  %v1313 = vunpack.c.l.b16 %v1178
  %v1314 = vunpack.c.l.b16 %v1179
  %v1315 = vunpack.c.l.b16 %v1180
  %v1316 = vunpack.c.l.b16 %v1181
  %v1317 = vunpack.c.l.b16 %v1182
  %v1318 = vunpack.c.l.b16 %v1183
  %v1319 = vunpack.c.l.b16 %v1184
  %v1320 = vunpack.c.l.b16 %v1185
  %v1321 = vunpack.c.l.b16 %v1186
  %v1322 = vunpack.c.l.b16 %v1187
  %v1323 = vunpack.c.l.b16 %v1188
  %v1324 = vunpack.c.l.b16 %v1189
  %v1325 = vunpack.c.l.b16 %v1190
  %v1326 = vunpack.c.l.b16 %v1191
  %v1327 = vunpack.c.l.b16 %v1192
  %v1328 = vunpack.c.l.b16 %v1193
  %v1329 = vunpack.c.l.b16 %v1194
  %v1330 = vunpack.c.l.b16 %v1195
  %v1331 = vunpack.c.l.b16 %v1196
  %v1332 = vunpack.c.l.b16 %v1197
  %v1333 = vunpack.c.l.b16 %v1198
  %v1334 = vunpack.c.l.b16 %v1199
  %v1335 = vunpack.c.l.b16 %v1200
  %v1336 = vunpack.c.l.b16 %v1201
  %v1337 = vunpack.c.l.b16 %v1202
  %v1338 = vunpack.c.l.b16 %v1203
  %v1339 = vunpack.c.l.b16 %v1204
  %v1340 = vunpack.c.l.b16 %v1205
  %v1341 = vunpack.c.l.b16 %v1206
  %v1342 = vunpack.c.l.b16 %v1207
  %v1343 = vunpack.c.l.b16 %v1208
  %v1344 = vunpack.c.l.b16 %v1209
  %v1345 = vunpack.c.l.b16 %v1210
  %v1346 = vunpack.c.l.b16 %v1211
  %v1347 = vunpack.c.l.b16 %v1212
  %v1348 = vunpack.c.l.b16 %v1213
  %v1349 = vunpack.c.l.b16 %v1214
  %v1350 = vunpack.c.l.b16 %v1215
  %v1351 = vunpack.c.l.b16 %v1216
  %v1352 = vunpack.c.l.b16 %v1217
  %v1353 = vunpack.c.l.b16 %v1218
  %v1354 = vunpack.c.l.b16 %v1219
  %v1355 = vunpack.c.l.b16 %v1220
  %v1356 = vunpack.c.l.b16 %v1221
  %v1357 = vunpack.c.l.b16 %v1222
  %v1358 = vunpack.c.l.b16 %v1223
  %v1359 = vunpack.c.l.b16 %v1224
  %v1360 = vunpack.c.l.b16 %v1225
  %v1361 = vunpack.c.l.b16 %v1226
  %v1362 = vunpack.c.l.b16 %v1227
  %v1363 = vunpack.c.l.b16 %v1228
  %v1364 = vpack.c.b16 %v1301, %v1300
  %v1365 = vpack.c.b16 %v1303, %v1302
  %v1366 = vpack.c.b16 %v1305, %v1304
  %v1367 = vpack.c.b16 %v1307, %v1306
  %v1368 = vpack.c.b16 %v1309, %v1308
  %v1369 = vpack.c.b16 %v1311, %v1310
  %v1370 = vpack.c.b16 %v1313, %v1312
  %v1371 = vpack.c.b16 %v1315, %v1314
  %v1372 = vpack.c.b16 %v1317, %v1316
  %v1373 = vpack.c.b16 %v1319, %v1318
  %v1374 = vpack.c.b16 %v1321, %v1320
  %v1375 = vpack.c.b16 %v1323, %v1322
  %v1376 = vpack.c.b16 %v1325, %v1324
  %v1377 = vpack.c.b16 %v1327, %v1326
  %v1378 = vpack.c.b16 %v1329, %v1328
  %v1379 = vpack.c.b16 %v1331, %v1330
  %v1380 = vpack.c.b16 %v1333, %v1332
  %v1381 = vpack.c.b16 %v1335, %v1334
  %v1382 = vpack.c.b16 %v1337, %v1336
  %v1383 = vpack.c.b16 %v1339, %v1338
  %v1384 = vpack.c.b16 %v1341, %v1340
  %v1385 = vpack.c.b16 %v1343, %v1342
  %v1386 = vpack.c.b16 %v1345, %v1344
  %v1387 = vpack.c.b16 %v1347, %v1346
  %v1388 = vpack.c.b16 %v1349, %v1348
  %v1389 = vpack.c.b16 %v1351, %v1350
  %v1390 = vpack.c.b16 %v1353, %v1352
  %v1391 = vpack.c.b16 %v1355, %v1354
  %v1392 = vpack.c.b16 %v1357, %v1356
  %v1393 = vpack.c.b16 %v1359, %v1358
  %v1394 = vpack.c.b16 %v1361, %v1360
  %v1395 = vpack.c.b16 %v1363, %v1362
  %1428 = vmatprep.subr.bf16.mxu0 0
  %1429 = vmatpush1.bf16.msra.mxu0 %v1371
  %1430 = vmatprep.subr.bf16.mxu0 0
  %1431 = vmatpush1.bf16.msra.mxu0 %v1370
  %1432 = vmatprep.subr.bf16.mxu0 0
  %1433 = vmatpush1.bf16.msra.mxu0 %v1369
  %1434 = vmatprep.subr.bf16.mxu0 0
  %1435 = vmatpush1.bf16.msra.mxu0 %v1368
  %1436 = vmatprep.subr.bf16.mxu0 0
  %1437 = vmatpush1.bf16.msra.mxu0 %v1367
  %1438 = vmatprep.subr.bf16.mxu0 0
  %1439 = vmatpush1.bf16.msra.mxu0 %v1366
  %1440 = vmatprep.subr.bf16.mxu0 0
  %1441 = vmatpush1.bf16.msra.mxu0 %v1365
  %1442 = vmatprep.subr.bf16.mxu0 0
  %1443 = vmatpush1.bf16.msra.mxu0 %v1364
  %1444 = vmatprep.subr.bf16.mxu0 0
  %1445 = vmatpush2.bf16.msra.mxu0 %v1379
  %1446 = vmatprep.subr.bf16.mxu0 0
  %1447 = vmatpush2.bf16.msra.mxu0 %v1378
  %1448 = vmatprep.subr.bf16.mxu0 0
  %1449 = vmatpush2.bf16.msra.mxu0 %v1377
  %1450 = vmatprep.subr.bf16.mxu0 0
  %1451 = vmatpush2.bf16.msra.mxu0 %v1376
  %1452 = vmatprep.subr.bf16.mxu0 0
  %1453 = vmatpush2.bf16.msra.mxu0 %v1375
  %1454 = vmatprep.subr.bf16.mxu0 0
  %1455 = vmatpush2.bf16.msra.mxu0 %v1374
  %1456 = vmatprep.subr.bf16.mxu0 0
  %1457 = vmatpush2.bf16.msra.mxu0 %v1373
  %1458 = vmatprep.subr.bf16.mxu0 0
  %1459 = vmatpush2.bf16.msra.mxu0 %v1372
  %1460 = vmatprep.mubr.bf16.mxu0 %v1162
  %1461 = vmatmul.mubr.bf16.gmra.mxu0 %v1161
  %v1462 = vpop.f32.mrf.mxu0
  %v1463 = vadd.f32 %v1234, %v1462
  %v1464 = vpop.f32.mrf.mxu0
  %v1465 = vpop.f32.mrf.mxu0
  %v1466 = vadd.f32 %v1234, %v1465
  %v1467 = vpop.f32.mrf.mxu0
  %1468 = vdwg.mxu0
  %1469 = vmatprep.subr.bf16.mxu0 0
  %1470 = vmatpush1.bf16.msra.mxu0 %v1387
  %1471 = vmatprep.subr.bf16.mxu0 0
  %1472 = vmatpush1.bf16.msra.mxu0 %v1386
  %1473 = vmatprep.subr.bf16.mxu0 0
  %1474 = vmatpush1.bf16.msra.mxu0 %v1385
  %1475 = vmatprep.subr.bf16.mxu0 0
  %1476 = vmatpush1.bf16.msra.mxu0 %v1384
  %1477 = vmatprep.subr.bf16.mxu0 0
  %1478 = vmatpush1.bf16.msra.mxu0 %v1383
  %1479 = vmatprep.subr.bf16.mxu0 0
  %1480 = vmatpush1.bf16.msra.mxu0 %v1382
  %1481 = vmatprep.subr.bf16.mxu0 0
  %1482 = vmatpush1.bf16.msra.mxu0 %v1381
  %1483 = vmatprep.subr.bf16.mxu0 0
  %1484 = vmatpush1.bf16.msra.mxu0 %v1380
  %1485 = vmatprep.subr.bf16.mxu0 0
  %1486 = vmatpush2.bf16.msra.mxu0 %v1395
  %1487 = vmatprep.subr.bf16.mxu0 0
  %1488 = vmatpush2.bf16.msra.mxu0 %v1394
  %1489 = vmatprep.subr.bf16.mxu0 0
  %1490 = vmatpush2.bf16.msra.mxu0 %v1393
  %1491 = vmatprep.subr.bf16.mxu0 0
  %1492 = vmatpush2.bf16.msra.mxu0 %v1392
  %1493 = vmatprep.subr.bf16.mxu0 0
  %1494 = vmatpush2.bf16.msra.mxu0 %v1391
  %1495 = vmatprep.subr.bf16.mxu0 0
  %1496 = vmatpush2.bf16.msra.mxu0 %v1390
  %1497 = vmatprep.subr.bf16.mxu0 0
  %1498 = vmatpush2.bf16.msra.mxu0 %v1389
  %1499 = vmatprep.subr.bf16.mxu0 0
  %1500 = vmatpush2.bf16.msra.mxu0 %v1388
  %1501 = vmatprep.mubr.bf16.mxu0 %v1164
  %1502 = vmatmul.mubr.bf16.gmra.mxu0 %v1163
  %v1503 = vpop.f32.mrf.mxu0
  %v1504 = vadd.f32 %v1463, %v1503
  %v1505 = vpop.f32.mrf.mxu0
  %v1506 = vpop.f32.mrf.mxu0
  %v1507 = vadd.f32 %v1466, %v1506
  %v1508 = vpop.f32.mrf.mxu0
  %1509 = vdwg.mxu0
  %v1510 = vld [vmem:[%s6] sm:$0x1]
  %v1511 = vld [vmem:[%s7] sm:$0x1]
  %1512 = vadd.xlane.f32.xlu0 %v848
  %v1513 = vpop.xlane.xlu0 %1512
  %1514 = vadd.xlane.f32.xlu0 %v849
  %v1515 = vpop.xlane.xlu0 %1514
  %v1516 = vmul.f32 %v1513, %v783
  %v1517 = vmul.f32 %v1515, %v783
  %v1521 = vunpack.c.l.s4 839922192
  %v1522 = vunpack.c.0.s8 %v1521
  %v1523 = vlaneseq
  %v1524 = vshrl.u32 %v1523, 7
  %v1525 = vsub.s32 %v1522, %v1524
  %v1526 = vrot.slane %v1516, %v1525
  %v1528 = vunpack.c.l.s4 1985246804
  %v1529 = vunpack.c.0.s8 %v1528
  %v1530 = vlaneseq
  %v1531 = vshrl.u32 %v1530, 7
  %v1532 = vsub.s32 %v1529, %v1531
  %v1533 = vrot.slane %v1516, %v1532
  %v1535 = vunpack.c.l.s4 839922192
  %v1536 = vunpack.c.0.s8 %v1535
  %v1537 = vlaneseq
  %v1538 = vshrl.u32 %v1537, 7
  %v1539 = vsub.s32 %v1536, %v1538
  %v1540 = vrot.slane %v1517, %v1539
  %v1542 = vunpack.c.l.s4 1985246804
  %v1543 = vunpack.c.0.s8 %v1542
  %v1544 = vlaneseq
  %v1545 = vshrl.u32 %v1544, 7
  %v1546 = vsub.s32 %v1543, %v1545
  %v1547 = vrot.slane %v1517, %v1546
  %v1552 = vsub.f32 %v840, %v1526
  %v1553 = vsub.f32 %v841, %v1533
  %v1554 = vsub.f32 %v842, %v1540
  %v1555 = vsub.f32 %v843, %v1547
  %v1556 = vmul.f32 %v1552, %v1552
  %v1557 = vmul.f32 %v1553, %v1553
  %v1558 = vmul.f32 %v1554, %v1554
  %v1559 = vmul.f32 %v1555, %v1555
  %v1564 = vcombine.low %v1556, %v1557
  %v1565 = vcombine.low %v1558, %v1559
  %1568 = vadd.xlane.f32.xlu0 %v1564
  %v1569 = vpop.xlane.xlu0 %1568
  %1570 = vadd.xlane.f32.xlu0 %v1565
  %v1571 = vpop.xlane.xlu0 %1570
  %v1572 = vmul.f32 %v1569, %v783
  %v1573 = vmul.f32 %v1571, %v783
  %v1574 = vadd.f32 %v1572, 1e-05
  %v1575 = vadd.f32 %v1573, 1e-05
  %v1576 = vrsqrt.pop %v1574
  %v1577 = vrsqrt.pop %v1575
  %v1581 = vunpack.c.l.s4 839922192
  %v1582 = vunpack.c.0.s8 %v1581
  %v1583 = vlaneseq
  %v1584 = vshrl.u32 %v1583, 7
  %v1585 = vsub.s32 %v1582, %v1584
  %v1586 = vrot.slane %v1576, %v1585
  %v1588 = vunpack.c.l.s4 1985246804
  %v1589 = vunpack.c.0.s8 %v1588
  %v1590 = vlaneseq
  %v1591 = vshrl.u32 %v1590, 7
  %v1592 = vsub.s32 %v1589, %v1591
  %v1593 = vrot.slane %v1576, %v1592
  %v1595 = vunpack.c.l.s4 839922192
  %v1596 = vunpack.c.0.s8 %v1595
  %v1597 = vlaneseq
  %v1598 = vshrl.u32 %v1597, 7
  %v1599 = vsub.s32 %v1596, %v1598
  %v1600 = vrot.slane %v1577, %v1599
  %v1602 = vunpack.c.l.s4 1985246804
  %v1603 = vunpack.c.0.s8 %v1602
  %v1604 = vlaneseq
  %v1605 = vshrl.u32 %v1604, 7
  %v1606 = vsub.s32 %v1603, %v1605
  %v1607 = vrot.slane %v1577, %v1606
  %v1612 = vmul.f32 %v1552, %v1586
  %v1613 = vmul.f32 %v1553, %v1593
  %v1614 = vmul.f32 %v1554, %v1600
  %v1615 = vmul.f32 %v1555, %v1607
  %v1617 = vlaneseq
  %v1618 = vshrl.u32 %v1617, 7
  %v1619 = vsub.s32 0, %v1618
  %v1620 = vrot.slane %v1510, %v1619
  %v1622 = vcombine.high %v1620, %v1620
  %v1624 = vmul.f32 %v1612, %v1620
  %v1625 = vmul.f32 %v1613, %v1622
  %v1626 = vmul.f32 %v1614, %v1620
  %v1627 = vmul.f32 %v1615, %v1622
  %v1629 = vlaneseq
  %v1630 = vshrl.u32 %v1629, 7
  %v1631 = vsub.s32 0, %v1630
  %v1632 = vrot.slane %v1511, %v1631
  %v1634 = vcombine.high %v1632, %v1632
  %v1636 = vadd.f32 %v1624, %v1632
  %v1637 = vadd.f32 %v1625, %v1634
  %v1638 = vadd.f32 %v1626, %v1632
  %v1639 = vadd.f32 %v1627, %v1634
  %v1644 = vcombine.low %v1636, %v1637
  %v1645 = vcombine.low %v1638, %v1639
  %v1648 = vadd.f32 %v1504, %v1644
  %v1649 = vadd.f32 %v1507, %v1645
  %v1650 = vpack.c.bf16 %v1649, %v1648
  %v1651 = vld [vmem:[%s12] sm:$0xf]
  %v1652 = vld [vmem:[%s12 + $0x4] sm:$0xf]
  %v1653 = vld [vmem:[%s12 + $0x8] sm:$0xf]
  %v1654 = vld [vmem:[%s12 + $0xc] sm:$0xf]
  %v1655 = vld [vmem:[%s12 + $0x10] sm:$0xf]
  %v1656 = vld [vmem:[%s12 + $0x14] sm:$0xf]
  %v1657 = vld [vmem:[%s12 + $0x18] sm:$0xf]
  %v1658 = vld [vmem:[%s12 + $0x1c] sm:$0xf]
  %v1659 = vld [vmem:[%s12 + $0x20] sm:$0xf]
  %v1660 = vld [vmem:[%s12 + $0x24] sm:$0xf]
  %v1661 = vld [vmem:[%s12 + $0x28] sm:$0xf]
  %v1662 = vld [vmem:[%s12 + $0x2c] sm:$0xf]
  %v1663 = vld [vmem:[%s12 + $0x30] sm:$0xf]
  %v1664 = vld [vmem:[%s12 + $0x34] sm:$0xf]
  %v1665 = vld [vmem:[%s12 + $0x38] sm:$0xf]
  %v1666 = vld [vmem:[%s12 + $0x3c] sm:$0xf]
  %v1667 = vld [vmem:[%s13] sm:$0x1]
  %v1669 = vlaneseq
  %v1670 = vshrl.u32 %v1669, 7
  %v1671 = vsub.s32 0, %v1670
  %v1672 = vrot.slane %v1667, %v1671
  %v1690 = vunpack.c.l.b16 %v1651
  %v1691 = vunpack.c.l.b16 %v1652
  %v1692 = vunpack.c.l.b16 %v1653
  %v1693 = vunpack.c.l.b16 %v1654
  %v1694 = vunpack.c.l.b16 %v1655
  %v1695 = vunpack.c.l.b16 %v1656
  %v1696 = vunpack.c.l.b16 %v1657
  %v1697 = vunpack.c.l.b16 %v1658
  %v1698 = vunpack.c.l.b16 %v1659
  %v1699 = vunpack.c.l.b16 %v1660
  %v1700 = vunpack.c.l.b16 %v1661
  %v1701 = vunpack.c.l.b16 %v1662
  %v1702 = vunpack.c.l.b16 %v1663
  %v1703 = vunpack.c.l.b16 %v1664
  %v1704 = vunpack.c.l.b16 %v1665
  %v1705 = vunpack.c.l.b16 %v1666
  %v1706 = vpack.c.b16 %v1691, %v1690
  %v1707 = vpack.c.b16 %v1693, %v1692
  %v1708 = vpack.c.b16 %v1695, %v1694
  %v1709 = vpack.c.b16 %v1697, %v1696
  %v1710 = vpack.c.b16 %v1699, %v1698
  %v1711 = vpack.c.b16 %v1701, %v1700
  %v1712 = vpack.c.b16 %v1703, %v1702
  %v1713 = vpack.c.b16 %v1705, %v1704
  %1722 = vmatprep.subr.bf16.mxu0 0
  %1723 = vmatpush1.bf16.msra.mxu0 %v1713
  %1724 = vmatprep.subr.bf16.mxu0 0
  %1725 = vmatpush1.bf16.msra.mxu0 %v1712
  %1726 = vmatprep.subr.bf16.mxu0 0
  %1727 = vmatpush1.bf16.msra.mxu0 %v1711
  %1728 = vmatprep.subr.bf16.mxu0 0
  %1729 = vmatpush1.bf16.msra.mxu0 %v1710
  %1730 = vmatprep.subr.bf16.mxu0 0
  %1731 = vmatpush1.bf16.msra.mxu0 %v1709
  %1732 = vmatprep.subr.bf16.mxu0 0
  %1733 = vmatpush1.bf16.msra.mxu0 %v1708
  %1734 = vmatprep.subr.bf16.mxu0 0
  %1735 = vmatpush1.bf16.msra.mxu0 %v1707
  %1736 = vmatprep.subr.bf16.mxu0 0
  %1737 = vmatpush1.bf16.msra.mxu0 %v1706
  %1738 = vmatprep.subr.bf16.mxu0 0
  %1739 = vmatpush2.bf16.msra.mxu0 0
  %1740 = vmatprep.subr.bf16.mxu0 0
  %1741 = vmatpush2.bf16.msra.mxu0 0
  %1742 = vmatprep.subr.bf16.mxu0 0
  %1743 = vmatpush2.bf16.msra.mxu0 0
  %1744 = vmatprep.subr.bf16.mxu0 0
  %1745 = vmatpush2.bf16.msra.mxu0 0
  %1746 = vmatprep.subr.bf16.mxu0 0
  %1747 = vmatpush2.bf16.msra.mxu0 0
  %1748 = vmatprep.subr.bf16.mxu0 0
  %1749 = vmatpush2.bf16.msra.mxu0 0
  %1750 = vmatprep.subr.bf16.mxu0 0
  %1751 = vmatpush2.bf16.msra.mxu0 0
  %1752 = vmatprep.subr.bf16.mxu0 0
  %1753 = vmatpush2.bf16.msra.mxu0 0
  %1754 = vmatprep.mubr.bf16.mxu0 0
  %1755 = vmatmul.mubr.bf16.gmra.mxu0 %v1650
  %v1756 = vpop.f32.mrf.mxu0
  %v1757 = vadd.f32 %v1672, %v1756
  %v1758 = vpop.f32.mrf.mxu0
  %v1759 = vpop.f32.mrf.mxu0
  %v1760 = vadd.f32 %v1672, %v1759
  %v1761 = vpop.f32.mrf.mxu0
  %1762 = vdwg.mxu0
  %v1763 = vmax.f32 %v1757, 0.0
  %v1764 = vmax.f32 %v1760, 0.0
  %v1767 = vcombine.high %v1763, %v1763
  %v1768 = vcombine.high %v1764, %v1764
  %v1771 = vld [vmem:[%s14] sm:$0xf]
  %vm1772 = vcmask 125952
  %v1773 = vsel %vm1772, %v1763, 0.0
  %v1774 = vsel %vm1772, %v1767, 0.0
  %v1775 = vadd.f32 %v1773, %v1774
  %v1776 = vsel %vm1772, %v1764, 0.0
  %v1777 = vadd.f32 %v1775, %v1776
  %v1778 = vsel %vm1772, %v1768, 0.0
  %v1779 = vadd.f32 %v1777, %v1778
  %v1780 = vadd.f32 %v1771, %v1779
  %1781 = vst.msk [vmem:[%s14] sm:$0xf] %vm1772, %v1780
  // Predicated region
  $region58: #{encoder_sparse_forward.1} parent=0 // pred_check
    _
  $region59: #{encoder_sparse_forward.1} parent=0 // pred_check_branch
    %1783 = sbr.rel (0) target = $region61
  $region60: #{encoder_sparse_forward.1} parent=0 // pred_region
    _
  $region61: #{encoder_sparse_forward.1} parent=0 // pred_fallthru
    _
  // Predicated region
  $region62: #{encoder_sparse_forward.1} parent=0 // pred_check
    _
  $region63: #{encoder_sparse_forward.1} parent=0 // pred_check_branch
    %1785 = sbr.rel (0) target = $region65
  $region64: #{encoder_sparse_forward.1} parent=0 // pred_region
    _
  $region65: #{encoder_sparse_forward.1} parent=0 // pred_fallthru
    _

</llo_original>
